<compile_context>
chip_gen: v6e
topology: v6e:2x2x1
jax: 0.10.0
libtpu: 0.0.40
codegen_flags: <defaults>
</compile_context>

<pallas_src>
import numpy as np
import jax
import jax.numpy as jnp
from jax import lax
from jax.experimental import pallas as pl
from jax.experimental.pallas import tpu as pltpu

EPS = 1e-5
LANES = 128


def _bn_relu(x, gamma, beta):
    # nn.BatchNorm1d (training mode): per-batch statistics, biased variance.
    mean = jnp.mean(x, axis=0, keepdims=True)
    var = jnp.mean((x - mean) ** 2, axis=0, keepdims=True)
    xn = (x - mean) * lax.rsqrt(var + EPS)
    return jnp.maximum(xn * gamma + beta, 0.0)


def _round8(n):
    return -(-n // 8) * 8


def pack_params(p):
    """Pack the 17 tiny parameter tensors into two lane-dense f32 slabs.

    * wh1 is pre-split into its hidden-state part (H, 40) and its input-column
      part (1, 40) so nothing has to be sliced out of a matmul operand in-kernel.
    * The g-gate columns (2H:3H) of wih / whh / bl are pre-scaled by 2 so the
      recurrence needs a single full-width sigmoid per step and recovers
      tanh(g_pre) as 2*sigmoid(2*g_pre) - 1.
    """
    H = p["whh"].shape[0]

    def scale_g(w):
        return w.at[:, 2 * H:3 * H].multiply(2.0)

    wih = scale_g(p["wih"])
    whh = scale_g(p["whh"])
    bl = scale_g(p["bl"])
    wh1_h = p["wh1"][:H, :]
    wh1_x = p["wh1"][H:, :]

    mats_list = [("we1", p["we1"]), ("we2", p["we2"]), ("whh", whh),
                 ("wh1_h", wh1_h), ("wh2", p["wh2"])]
    vecs_list = [("be1", p["be1"]), ("g1", p["g1"]), ("bt1", p["bt1"]),
                 ("be2", p["be2"]), ("wih", wih), ("bl", bl),
                 ("wh1_x", wh1_x), ("bh1", p["bh1"]), ("g2", p["g2"]),
                 ("bt2", p["bt2"]), ("bh2", p["bh2"])]

    # Matrix slab: each block starts on an 8-sublane boundary, 128 lanes wide.
    mat_layout, row = {}, 0
    for name, w in mats_list:
        mat_layout[name] = (row, tuple(w.shape))
        row += _round8(w.shape[0])
    mats = jnp.zeros((row, LANES), jnp.float32)
    for name, w in mats_list:
        r, _ = mat_layout[name]
        mats = mats.at[r:r + w.shape[0], :w.shape[1]].set(w)

    # Vector slab: one (1, N<=128) row-vector per row.
    vec_layout = {}
    vecs = jnp.zeros((_round8(len(vecs_list)), LANES), jnp.float32)
    for k, (name, v) in enumerate(vecs_list):
        vec_layout[name] = (k, v.shape[1])
        vecs = vecs.at[k, :v.shape[1]].set(v[0])

    return dict(mats=mats, vecs=vecs, mat_layout=mat_layout,
                vec_layout=vec_layout, H=H, out_size=p["wh2"].shape[1])


def _build_kernel(mat_layout, vec_layout, H, T):
    def kernel(inputs_ref, hist_ref, mats_ref, vecs_ref, out_ref):
        def mat(name):
            r, (nr, nc) = mat_layout[name]
            return mats_ref[r:r + nr, 0:nc]

        vecs = vecs_ref[...]                            # (rows, 128): a couple of vregs
        def vec(name):
            r, nc = vec_layout[name]
            return vecs[r:r + 1, 0:nc]

        x_all = inputs_ref[...]                         # (B, T)

        # ---- encoder MLP: hist -> h_0 (initial hidden state), c_0 = 0 ----
        e = jnp.dot(hist_ref[...], mat("we1"),
                    preferred_element_type=jnp.float32) + vec("be1")
        e = _bn_relu(e, vec("g1"), vec("bt1"))
        h = jnp.dot(e, mat("we2"),
                    preferred_element_type=jnp.float32) + vec("be2")    # (B, H)
        c = jnp.zeros_like(h)

        whh = mat("whh")                                # (H, 4H), g-cols pre-scaled x2

        # ---- hoisted input->gate contribution (input_size == 1 => outer product)
        # One batched broadcast-mul + add covering all T steps: (T, B, 4H).
        wih_b = vec("wih").reshape(1, 1, 4 * H)
        bl_b = vec("bl").reshape(1, 1, 4 * H)
        x_contrib = x_all.T[:, :, None] * wih_b + bl_b  # (T, B, 4H), off the serial chain

        # ---- fully unrolled LSTM recurrence (PyTorch gate order: i, f, g, o) ----
        # TODO(synk): weight-stationary MXU (matmul_push_rhs/acc_lhs/pop) or pure-VPU
        # expansion of h@whh are candidate replacements for jnp.dot; benchmark per chip.
        for t in range(T):
            gates = x_contrib[t] + jnp.dot(h, whh, preferred_element_type=jnp.float32)
            s = jax.nn.sigmoid(gates)                   # single full-width EUP push
            i = s[:, 0:H]
            f = s[:, H:2 * H]
            o = s[:, 3 * H:4 * H]
            g = 2.0 * s[:, 2 * H:3 * H] - 1.0           # == tanh(unscaled g preact)
            c = f * c + i * g
            h = o * jnp.tanh(c)

        # ---- h2o MLP on cat(last hidden, last input): matmul split at the concat ----
        x_last = x_all[:, T - 1:T]                      # (B, 1) == inputs[:, -1, None]
        z = (jnp.dot(h, mat("wh1_h"), preferred_element_type=jnp.float32)
             + x_last * vec("wh1_x") + vec("bh1"))
        z = _bn_relu(z, vec("g2"), vec("bt2"))
        y = jnp.dot(z, mat("wh2"), preferred_element_type=jnp.float32) + vec("bh2")
        out_ref[...] = y                                # (B, output_size)

    return kernel


def lstm_with_encoder(inputs, hist, packed):
    B, T = inputs.shape
    kernel = _build_kernel(packed["mat_layout"], packed["vec_layout"],
                           packed["H"], T)
    # Single program; 4 input DMAs (inputs, hist, mats slab, vecs slab) + 1 output.
    return pl.pallas_call(
        kernel,
        out_shape=jax.ShapeDtypeStruct((B, packed["out_size"]), jnp.float32),
        in_specs=[pl.BlockSpec(memory_space=pltpu.MemorySpace.VMEM)] * 4,
        out_specs=pl.BlockSpec(memory_space=pltpu.MemorySpace.VMEM),
    )(inputs, hist, packed["mats"], packed["vecs"])


def reference_forward(inputs, hist, p):
    # Pure-JAX reference with the original (unpacked, unscaled) parameters.
    e = hist @ p["we1"] + p["be1"]
    e = _bn_relu(e, p["g1"], p["bt1"])
    h = e @ p["we2"] + p["be2"]
    c = jnp.zeros_like(h)
    H = p["whh"].shape[0]
    B, T = inputs.shape
    for t in range(T):
        x_t = inputs[:, t:t + 1]
        gates = x_t @ p["wih"] + h @ p["whh"] + p["bl"]
        i = jax.nn.sigmoid(gates[:, 0:H])
        f = jax.nn.sigmoid(gates[:, H:2 * H])
        g = jnp.tanh(gates[:, 2 * H:3 * H])
        o = jax.nn.sigmoid(gates[:, 3 * H:4 * H])
        c = f * c + i * g
        h = o * jnp.tanh(c)
    combined = jnp.concatenate([h, inputs[:, -1:]], axis=1)
    z = _bn_relu(combined @ p["wh1"] + p["bh1"], p["g2"], p["bt2"])
    return z @ p["wh2"] + p["bh2"]


def init_params(key, input_size=1, hidden_size=16, output_size=1,
                history_size=8, enc_width=40):
    ks = jax.random.split(key, 11)
    H = hidden_size

    def w(k, shape, scale=0.1):
        return (scale * jax.random.normal(k, shape)).astype(jnp.float32)

    return dict(
        # encoder Network([history_size, 40, hidden_size])
        we1=w(ks[0], (history_size, enc_width)),
        be1=w(ks[1], (1, enc_width)),
        g1=jnp.ones((1, enc_width), jnp.float32),
        bt1=jnp.zeros((1, enc_width), jnp.float32),
        we2=w(ks[2], (enc_width, H)),
        be2=w(ks[3], (1, H)),
        # nn.LSTM(input_size, hidden_size): weights transposed, biases fused (b_ih + b_hh)
        wih=w(ks[4], (input_size, 4 * H)),
        whh=w(ks[5], (H, 4 * H)),
        bl=w(ks[6], (1, 4 * H)),
        # h2o Network([hidden_size + input_size, 40, output_size])
        wh1=w(ks[7], (H + input_size, enc_width)),
        bh1=w(ks[8], (1, enc_width)),
        g2=jnp.ones((1, enc_width), jnp.float32),
        bt2=jnp.zeros((1, enc_width), jnp.float32),
        wh2=w(ks[9], (enc_width, output_size)),
        bh2=w(ks[10], (1, output_size)),
    )


if __name__ == "__main__":
    B, T, HIST, HIDDEN = 4, 8, 8, 16
    key = jax.random.PRNGKey(0)
    k_in, k_hist, k_par = jax.random.split(key, 3)

    inputs = jax.random.normal(k_in, (B, T), dtype=jnp.float32)   # 2-D inputs branch
    hist = jax.random.normal(k_hist, (B, HIST), dtype=jnp.float32)
    params = init_params(k_par, input_size=1, hidden_size=HIDDEN,
                         output_size=1, history_size=HIST)
    packed = pack_params(params)                                  # one-time host-side prep

    y = jax.block_until_ready(lstm_with_encoder(inputs, hist, packed))
    y_ref = jax.block_until_ready(reference_forward(inputs, hist, params))
    np.testing.assert_allclose(np.asarray(y), np.asarray(y_ref), rtol=1e-4, atol=1e-4)

    print("KERNEL_OK")
</pallas_src>

<mosaic_0001>
module attributes {stable_mosaic.version = 11 : i64} {
  func.func @kernel(%arg0: memref<4x8xf32, #tpu.memory_space<vmem>>, %arg1: memref<4x8xf32, #tpu.memory_space<vmem>>, %arg2: memref<120x128xf32, #tpu.memory_space<vmem>>, %arg3: memref<16x128xf32, #tpu.memory_space<vmem>>, %arg4: memref<4x1xf32, #tpu.memory_space<vmem>>) attributes {dimension_semantics = [], scalar_prefetch = 0 : i64, scratch_operands = 0 : i64, tpu.core_type = #tpu.core_type<tc>} {
    %c0 = arith.constant 0 : index
    %c0_0 = arith.constant 0 : index
    %0 = vector.load %arg3[%c0, %c0_0] : memref<16x128xf32, #tpu.memory_space<vmem>>, vector<16x128xf32>
    %c0_1 = arith.constant 0 : index
    %c0_2 = arith.constant 0 : index
    %1 = vector.load %arg0[%c0_1, %c0_2] : memref<4x8xf32, #tpu.memory_space<vmem>>, vector<4x8xf32>
    %c0_3 = arith.constant 0 : index
    %c0_4 = arith.constant 0 : index
    %2 = vector.load %arg1[%c0_3, %c0_4] : memref<4x8xf32, #tpu.memory_space<vmem>>, vector<4x8xf32>
    %c0_5 = arith.constant 0 : index
    %c0_6 = arith.constant 0 : index
    %3 = vector.load %arg2[%c0_5, %c0_6] : memref<120x128xf32, #tpu.memory_space<vmem>>, vector<8x40xf32>
    %cst = arith.constant dense<0.000000e+00> : vector<4x40xf32>
    %4 = tpu.matmul %2, %3, %cst {dimension_numbers = #tpu.dot_dimension_numbers<[1], [0], [0], [1], [0, 0, 1, 1], [], []>} : vector<4x8xf32>, vector<8x40xf32>, vector<4x40xf32> -> vector<4x40xf32>
    %5 = vector.extract_strided_slice %0 {offsets = [0, 0], sizes = [1, 40], strides = [1, 1]} : vector<16x128xf32> to vector<1x40xf32>
    %6 = vector.broadcast %5 : vector<1x40xf32> to vector<4x40xf32>
    %7 = arith.addf %4, %6 : vector<4x40xf32>
    %8 = vector.extract_strided_slice %0 {offsets = [1, 0], sizes = [1, 40], strides = [1, 1]} : vector<16x128xf32> to vector<1x40xf32>
    %9 = vector.extract_strided_slice %0 {offsets = [2, 0], sizes = [1, 40], strides = [1, 1]} : vector<16x128xf32> to vector<1x40xf32>
    %cst_7 = arith.constant dense<0.000000e+00> : vector<40xf32>
    %10 = vector.multi_reduction <add>, %7, %cst_7 [0] : vector<4x40xf32> to vector<40xf32>
    %11 = vector.shape_cast %10 : vector<40xf32> to vector<1x40xf32>
    %cst_8 = arith.constant 4.000000e+00 : f32
    %12 = vector.broadcast %cst_8 : f32 to vector<1x40xf32>
    %13 = arith.divf %11, %12 : vector<1x40xf32>
    %14 = vector.broadcast %13 : vector<1x40xf32> to vector<4x40xf32>
    %15 = arith.subf %7, %14 : vector<4x40xf32>
    %16 = arith.mulf %15, %15 : vector<4x40xf32>
    %cst_9 = arith.constant dense<0.000000e+00> : vector<40xf32>
    %17 = vector.multi_reduction <add>, %16, %cst_9 [0] : vector<4x40xf32> to vector<40xf32>
    %18 = vector.shape_cast %17 : vector<40xf32> to vector<1x40xf32>
    %cst_10 = arith.constant 4.000000e+00 : f32
    %19 = vector.broadcast %cst_10 : f32 to vector<1x40xf32>
    %20 = arith.divf %18, %19 : vector<1x40xf32>
    %21 = vector.broadcast %13 : vector<1x40xf32> to vector<4x40xf32>
    %22 = arith.subf %7, %21 : vector<4x40xf32>
    %cst_11 = arith.constant 9.99999974E-6 : f32
    %23 = vector.broadcast %cst_11 : f32 to vector<1x40xf32>
    %24 = arith.addf %20, %23 : vector<1x40xf32>
    %25 = math.rsqrt %24 : vector<1x40xf32>
    %26 = vector.broadcast %25 : vector<1x40xf32> to vector<4x40xf32>
    %27 = arith.mulf %22, %26 : vector<4x40xf32>
    %28 = vector.broadcast %8 : vector<1x40xf32> to vector<4x40xf32>
    %29 = arith.mulf %27, %28 : vector<4x40xf32>
    %30 = vector.broadcast %9 : vector<1x40xf32> to vector<4x40xf32>
    %31 = arith.addf %29, %30 : vector<4x40xf32>
    %cst_12 = arith.constant 0.000000e+00 : f32
    %32 = vector.broadcast %cst_12 : f32 to vector<4x40xf32>
    %33 = arith.maximumf %31, %32 : vector<4x40xf32>
    %c8 = arith.constant 8 : index
    %c0_13 = arith.constant 0 : index
    %34 = vector.load %arg2[%c8, %c0_13] : memref<120x128xf32, #tpu.memory_space<vmem>>, vector<40x16xf32>
    %cst_14 = arith.constant dense<0.000000e+00> : vector<4x16xf32>
    %35 = tpu.matmul %33, %34, %cst_14 {dimension_numbers = #tpu.dot_dimension_numbers<[1], [0], [0], [1], [0, 0, 1, 1], [], []>} : vector<4x40xf32>, vector<40x16xf32>, vector<4x16xf32> -> vector<4x16xf32>
    %36 = vector.extract_strided_slice %0 {offsets = [3, 0], sizes = [1, 16], strides = [1, 1]} : vector<16x128xf32> to vector<1x16xf32>
    %37 = vector.broadcast %36 : vector<1x16xf32> to vector<4x16xf32>
    %38 = arith.addf %35, %37 : vector<4x16xf32>
    %cst_15 = arith.constant 0.000000e+00 : f32
    %39 = vector.broadcast %cst_15 : f32 to vector<4x16xf32>
    %c48 = arith.constant 48 : index
    %c0_16 = arith.constant 0 : index
    %40 = vector.load %arg2[%c48, %c0_16] : memref<120x128xf32, #tpu.memory_space<vmem>>, vector<16x64xf32>
    %41 = vector.extract_strided_slice %0 {offsets = [4, 0], sizes = [1, 64], strides = [1, 1]} : vector<16x128xf32> to vector<1x64xf32>
    %42 = vector.shape_cast %41 : vector<1x64xf32> to vector<1x1x64xf32>
    %43 = vector.extract_strided_slice %0 {offsets = [5, 0], sizes = [1, 64], strides = [1, 1]} : vector<16x128xf32> to vector<1x64xf32>
    %44 = vector.shape_cast %43 : vector<1x64xf32> to vector<1x1x64xf32>
    %45 = tpu.transpose %1, [1, 0] : vector<4x8xf32> -> vector<8x4xf32>
    %46 = vector.shape_cast %45 : vector<8x4xf32> to vector<8x4x1xf32>
    %47 = vector.broadcast %46 : vector<8x4x1xf32> to vector<8x4x64xf32>
    %48 = vector.broadcast %42 : vector<1x1x64xf32> to vector<8x4x64xf32>
    %49 = arith.mulf %47, %48 : vector<8x4x64xf32>
    %50 = vector.broadcast %44 : vector<1x1x64xf32> to vector<8x4x64xf32>
    %51 = arith.addf %49, %50 : vector<8x4x64xf32>
    %52 = vector.extract_strided_slice %51 {offsets = [0, 0, 0], sizes = [1, 4, 64], strides = [1, 1, 1]} : vector<8x4x64xf32> to vector<1x4x64xf32>
    %53 = vector.shape_cast %52 : vector<1x4x64xf32> to vector<4x64xf32>
    %cst_17 = arith.constant dense<0.000000e+00> : vector<4x64xf32>
    %54 = tpu.matmul %38, %40, %cst_17 {dimension_numbers = #tpu.dot_dimension_numbers<[1], [0], [0], [1], [0, 0, 1, 1], [], []>} : vector<4x16xf32>, vector<16x64xf32>, vector<4x64xf32> -> vector<4x64xf32>
    %55 = arith.addf %53, %54 : vector<4x64xf32>
    %56 = arith.negf %55 : vector<4x64xf32>
    %57 = math.exp %56 : vector<4x64xf32>
    %cst_18 = arith.constant 1.000000e+00 : f32
    %58 = vector.broadcast %cst_18 : f32 to vector<4x64xf32>
    %59 = arith.addf %58, %57 : vector<4x64xf32>
    %60 = arith.divf %58, %59 : vector<4x64xf32>
    %61 = vector.extract_strided_slice %60 {offsets = [0, 0], sizes = [4, 16], strides = [1, 1]} : vector<4x64xf32> to vector<4x16xf32>
    %62 = vector.extract_strided_slice %60 {offsets = [0, 16], sizes = [4, 16], strides = [1, 1]} : vector<4x64xf32> to vector<4x16xf32>
    %63 = vector.extract_strided_slice %60 {offsets = [0, 48], sizes = [4, 16], strides = [1, 1]} : vector<4x64xf32> to vector<4x16xf32>
    %64 = vector.extract_strided_slice %60 {offsets = [0, 32], sizes = [4, 16], strides = [1, 1]} : vector<4x64xf32> to vector<4x16xf32>
    %cst_19 = arith.constant 2.000000e+00 : f32
    %65 = vector.broadcast %cst_19 : f32 to vector<4x16xf32>
    %66 = arith.mulf %65, %64 : vector<4x16xf32>
    %cst_20 = arith.constant 1.000000e+00 : f32
    %67 = vector.broadcast %cst_20 : f32 to vector<4x16xf32>
    %68 = arith.subf %66, %67 : vector<4x16xf32>
    %69 = arith.mulf %62, %39 : vector<4x16xf32>
    %70 = arith.mulf %61, %68 : vector<4x16xf32>
    %71 = arith.addf %69, %70 : vector<4x16xf32>
    %72 = math.tanh %71 : vector<4x16xf32>
    %73 = arith.mulf %63, %72 : vector<4x16xf32>
    %74 = vector.extract_strided_slice %51 {offsets = [1, 0, 0], sizes = [1, 4, 64], strides = [1, 1, 1]} : vector<8x4x64xf32> to vector<1x4x64xf32>
    %75 = vector.shape_cast %74 : vector<1x4x64xf32> to vector<4x64xf32>
    %cst_21 = arith.constant dense<0.000000e+00> : vector<4x64xf32>
    %76 = tpu.matmul %73, %40, %cst_21 {dimension_numbers = #tpu.dot_dimension_numbers<[1], [0], [0], [1], [0, 0, 1, 1], [], []>} : vector<4x16xf32>, vector<16x64xf32>, vector<4x64xf32> -> vector<4x64xf32>
    %77 = arith.addf %75, %76 : vector<4x64xf32>
    %78 = arith.negf %77 : vector<4x64xf32>
    %79 = math.exp %78 : vector<4x64xf32>
    %cst_22 = arith.constant 1.000000e+00 : f32
    %80 = vector.broadcast %cst_22 : f32 to vector<4x64xf32>
    %81 = arith.addf %80, %79 : vector<4x64xf32>
    %82 = arith.divf %80, %81 : vector<4x64xf32>
    %83 = vector.extract_strided_slice %82 {offsets = [0, 0], sizes = [4, 16], strides = [1, 1]} : vector<4x64xf32> to vector<4x16xf32>
    %84 = vector.extract_strided_slice %82 {offsets = [0, 16], sizes = [4, 16], strides = [1, 1]} : vector<4x64xf32> to vector<4x16xf32>
    %85 = vector.extract_strided_slice %82 {offsets = [0, 48], sizes = [4, 16], strides = [1, 1]} : vector<4x64xf32> to vector<4x16xf32>
    %86 = vector.extract_strided_slice %82 {offsets = [0, 32], sizes = [4, 16], strides = [1, 1]} : vector<4x64xf32> to vector<4x16xf32>
    %cst_23 = arith.constant 2.000000e+00 : f32
    %87 = vector.broadcast %cst_23 : f32 to vector<4x16xf32>
    %88 = arith.mulf %87, %86 : vector<4x16xf32>
    %cst_24 = arith.constant 1.000000e+00 : f32
    %89 = vector.broadcast %cst_24 : f32 to vector<4x16xf32>
    %90 = arith.subf %88, %89 : vector<4x16xf32>
    %91 = arith.mulf %84, %71 : vector<4x16xf32>
    %92 = arith.mulf %83, %90 : vector<4x16xf32>
    %93 = arith.addf %91, %92 : vector<4x16xf32>
    %94 = math.tanh %93 : vector<4x16xf32>
    %95 = arith.mulf %85, %94 : vector<4x16xf32>
    %96 = vector.extract_strided_slice %51 {offsets = [2, 0, 0], sizes = [1, 4, 64], strides = [1, 1, 1]} : vector<8x4x64xf32> to vector<1x4x64xf32>
    %97 = vector.shape_cast %96 : vector<1x4x64xf32> to vector<4x64xf32>
    %cst_25 = arith.constant dense<0.000000e+00> : vector<4x64xf32>
    %98 = tpu.matmul %95, %40, %cst_25 {dimension_numbers = #tpu.dot_dimension_numbers<[1], [0], [0], [1], [0, 0, 1, 1], [], []>} : vector<4x16xf32>, vector<16x64xf32>, vector<4x64xf32> -> vector<4x64xf32>
    %99 = arith.addf %97, %98 : vector<4x64xf32>
    %100 = arith.negf %99 : vector<4x64xf32>
    %101 = math.exp %100 : vector<4x64xf32>
    %cst_26 = arith.constant 1.000000e+00 : f32
    %102 = vector.broadcast %cst_26 : f32 to vector<4x64xf32>
    %103 = arith.addf %102, %101 : vector<4x64xf32>
    %104 = arith.divf %102, %103 : vector<4x64xf32>
    %105 = vector.extract_strided_slice %104 {offsets = [0, 0], sizes = [4, 16], strides = [1, 1]} : vector<4x64xf32> to vector<4x16xf32>
    %106 = vector.extract_strided_slice %104 {offsets = [0, 16], sizes = [4, 16], strides = [1, 1]} : vector<4x64xf32> to vector<4x16xf32>
    %107 = vector.extract_strided_slice %104 {offsets = [0, 48], sizes = [4, 16], strides = [1, 1]} : vector<4x64xf32> to vector<4x16xf32>
    %108 = vector.extract_strided_slice %104 {offsets = [0, 32], sizes = [4, 16], strides = [1, 1]} : vector<4x64xf32> to vector<4x16xf32>
    %cst_27 = arith.constant 2.000000e+00 : f32
    %109 = vector.broadcast %cst_27 : f32 to vector<4x16xf32>
    %110 = arith.mulf %109, %108 : vector<4x16xf32>
    %cst_28 = arith.constant 1.000000e+00 : f32
    %111 = vector.broadcast %cst_28 : f32 to vector<4x16xf32>
    %112 = arith.subf %110, %111 : vector<4x16xf32>
    %113 = arith.mulf %106, %93 : vector<4x16xf32>
    %114 = arith.mulf %105, %112 : vector<4x16xf32>
    %115 = arith.addf %113, %114 : vector<4x16xf32>
    %116 = math.tanh %115 : vector<4x16xf32>
    %117 = arith.mulf %107, %116 : vector<4x16xf32>
    %118 = vector.extract_strided_slice %51 {offsets = [3, 0, 0], sizes = [1, 4, 64], strides = [1, 1, 1]} : vector<8x4x64xf32> to vector<1x4x64xf32>
    %119 = vector.shape_cast %118 : vector<1x4x64xf32> to vector<4x64xf32>
    %cst_29 = arith.constant dense<0.000000e+00> : vector<4x64xf32>
    %120 = tpu.matmul %117, %40, %cst_29 {dimension_numbers = #tpu.dot_dimension_numbers<[1], [0], [0], [1], [0, 0, 1, 1], [], []>} : vector<4x16xf32>, vector<16x64xf32>, vector<4x64xf32> -> vector<4x64xf32>
    %121 = arith.addf %119, %120 : vector<4x64xf32>
    %122 = arith.negf %121 : vector<4x64xf32>
    %123 = math.exp %122 : vector<4x64xf32>
    %cst_30 = arith.constant 1.000000e+00 : f32
    %124 = vector.broadcast %cst_30 : f32 to vector<4x64xf32>
    %125 = arith.addf %124, %123 : vector<4x64xf32>
    %126 = arith.divf %124, %125 : vector<4x64xf32>
    %127 = vector.extract_strided_slice %126 {offsets = [0, 0], sizes = [4, 16], strides = [1, 1]} : vector<4x64xf32> to vector<4x16xf32>
    %128 = vector.extract_strided_slice %126 {offsets = [0, 16], sizes = [4, 16], strides = [1, 1]} : vector<4x64xf32> to vector<4x16xf32>
    %129 = vector.extract_strided_slice %126 {offsets = [0, 48], sizes = [4, 16], strides = [1, 1]} : vector<4x64xf32> to vector<4x16xf32>
    %130 = vector.extract_strided_slice %126 {offsets = [0, 32], sizes = [4, 16], strides = [1, 1]} : vector<4x64xf32> to vector<4x16xf32>
    %cst_31 = arith.constant 2.000000e+00 : f32
    %131 = vector.broadcast %cst_31 : f32 to vector<4x16xf32>
    %132 = arith.mulf %131, %130 : vector<4x16xf32>
    %cst_32 = arith.constant 1.000000e+00 : f32
    %133 = vector.broadcast %cst_32 : f32 to vector<4x16xf32>
    %134 = arith.subf %132, %133 : vector<4x16xf32>
    %135 = arith.mulf %128, %115 : vector<4x16xf32>
    %136 = arith.mulf %127, %134 : vector<4x16xf32>
    %137 = arith.addf %135, %136 : vector<4x16xf32>
    %138 = math.tanh %137 : vector<4x16xf32>
    %139 = arith.mulf %129, %138 : vector<4x16xf32>
    %140 = vector.extract_strided_slice %51 {offsets = [4, 0, 0], sizes = [1, 4, 64], strides = [1, 1, 1]} : vector<8x4x64xf32> to vector<1x4x64xf32>
    %141 = vector.shape_cast %140 : vector<1x4x64xf32> to vector<4x64xf32>
    %cst_33 = arith.constant dense<0.000000e+00> : vector<4x64xf32>
    %142 = tpu.matmul %139, %40, %cst_33 {dimension_numbers = #tpu.dot_dimension_numbers<[1], [0], [0], [1], [0, 0, 1, 1], [], []>} : vector<4x16xf32>, vector<16x64xf32>, vector<4x64xf32> -> vector<4x64xf32>
    %143 = arith.addf %141, %142 : vector<4x64xf32>
    %144 = arith.negf %143 : vector<4x64xf32>
    %145 = math.exp %144 : vector<4x64xf32>
    %cst_34 = arith.constant 1.000000e+00 : f32
    %146 = vector.broadcast %cst_34 : f32 to vector<4x64xf32>
    %147 = arith.addf %146, %145 : vector<4x64xf32>
    %148 = arith.divf %146, %147 : vector<4x64xf32>
    %149 = vector.extract_strided_slice %148 {offsets = [0, 0], sizes = [4, 16], strides = [1, 1]} : vector<4x64xf32> to vector<4x16xf32>
    %150 = vector.extract_strided_slice %148 {offsets = [0, 16], sizes = [4, 16], strides = [1, 1]} : vector<4x64xf32> to vector<4x16xf32>
    %151 = vector.extract_strided_slice %148 {offsets = [0, 48], sizes = [4, 16], strides = [1, 1]} : vector<4x64xf32> to vector<4x16xf32>
    %152 = vector.extract_strided_slice %148 {offsets = [0, 32], sizes = [4, 16], strides = [1, 1]} : vector<4x64xf32> to vector<4x16xf32>
    %cst_35 = arith.constant 2.000000e+00 : f32
    %153 = vector.broadcast %cst_35 : f32 to vector<4x16xf32>
    %154 = arith.mulf %153, %152 : vector<4x16xf32>
    %cst_36 = arith.constant 1.000000e+00 : f32
    %155 = vector.broadcast %cst_36 : f32 to vector<4x16xf32>
    %156 = arith.subf %154, %155 : vector<4x16xf32>
    %157 = arith.mulf %150, %137 : vector<4x16xf32>
    %158 = arith.mulf %149, %156 : vector<4x16xf32>
    %159 = arith.addf %157, %158 : vector<4x16xf32>
    %160 = math.tanh %159 : vector<4x16xf32>
    %161 = arith.mulf %151, %160 : vector<4x16xf32>
    %162 = vector.extract_strided_slice %51 {offsets = [5, 0, 0], sizes = [1, 4, 64], strides = [1, 1, 1]} : vector<8x4x64xf32> to vector<1x4x64xf32>
    %163 = vector.shape_cast %162 : vector<1x4x64xf32> to vector<4x64xf32>
    %cst_37 = arith.constant dense<0.000000e+00> : vector<4x64xf32>
    %164 = tpu.matmul %161, %40, %cst_37 {dimension_numbers = #tpu.dot_dimension_numbers<[1], [0], [0], [1], [0, 0, 1, 1], [], []>} : vector<4x16xf32>, vector<16x64xf32>, vector<4x64xf32> -> vector<4x64xf32>
    %165 = arith.addf %163, %164 : vector<4x64xf32>
    %166 = arith.negf %165 : vector<4x64xf32>
    %167 = math.exp %166 : vector<4x64xf32>
    %cst_38 = arith.constant 1.000000e+00 : f32
    %168 = vector.broadcast %cst_38 : f32 to vector<4x64xf32>
    %169 = arith.addf %168, %167 : vector<4x64xf32>
    %170 = arith.divf %168, %169 : vector<4x64xf32>
    %171 = vector.extract_strided_slice %170 {offsets = [0, 0], sizes = [4, 16], strides = [1, 1]} : vector<4x64xf32> to vector<4x16xf32>
    %172 = vector.extract_strided_slice %170 {offsets = [0, 16], sizes = [4, 16], strides = [1, 1]} : vector<4x64xf32> to vector<4x16xf32>
    %173 = vector.extract_strided_slice %170 {offsets = [0, 48], sizes = [4, 16], strides = [1, 1]} : vector<4x64xf32> to vector<4x16xf32>
    %174 = vector.extract_strided_slice %170 {offsets = [0, 32], sizes = [4, 16], strides = [1, 1]} : vector<4x64xf32> to vector<4x16xf32>
    %cst_39 = arith.constant 2.000000e+00 : f32
    %175 = vector.broadcast %cst_39 : f32 to vector<4x16xf32>
    %176 = arith.mulf %175, %174 : vector<4x16xf32>
    %cst_40 = arith.constant 1.000000e+00 : f32
    %177 = vector.broadcast %cst_40 : f32 to vector<4x16xf32>
    %178 = arith.subf %176, %177 : vector<4x16xf32>
    %179 = arith.mulf %172, %159 : vector<4x16xf32>
    %180 = arith.mulf %171, %178 : vector<4x16xf32>
    %181 = arith.addf %179, %180 : vector<4x16xf32>
    %182 = math.tanh %181 : vector<4x16xf32>
    %183 = arith.mulf %173, %182 : vector<4x16xf32>
    %184 = vector.extract_strided_slice %51 {offsets = [6, 0, 0], sizes = [1, 4, 64], strides = [1, 1, 1]} : vector<8x4x64xf32> to vector<1x4x64xf32>
    %185 = vector.shape_cast %184 : vector<1x4x64xf32> to vector<4x64xf32>
    %cst_41 = arith.constant dense<0.000000e+00> : vector<4x64xf32>
    %186 = tpu.matmul %183, %40, %cst_41 {dimension_numbers = #tpu.dot_dimension_numbers<[1], [0], [0], [1], [0, 0, 1, 1], [], []>} : vector<4x16xf32>, vector<16x64xf32>, vector<4x64xf32> -> vector<4x64xf32>
    %187 = arith.addf %185, %186 : vector<4x64xf32>
    %188 = arith.negf %187 : vector<4x64xf32>
    %189 = math.exp %188 : vector<4x64xf32>
    %cst_42 = arith.constant 1.000000e+00 : f32
    %190 = vector.broadcast %cst_42 : f32 to vector<4x64xf32>
    %191 = arith.addf %190, %189 : vector<4x64xf32>
    %192 = arith.divf %190, %191 : vector<4x64xf32>
    %193 = vector.extract_strided_slice %192 {offsets = [0, 0], sizes = [4, 16], strides = [1, 1]} : vector<4x64xf32> to vector<4x16xf32>
    %194 = vector.extract_strided_slice %192 {offsets = [0, 16], sizes = [4, 16], strides = [1, 1]} : vector<4x64xf32> to vector<4x16xf32>
    %195 = vector.extract_strided_slice %192 {offsets = [0, 48], sizes = [4, 16], strides = [1, 1]} : vector<4x64xf32> to vector<4x16xf32>
    %196 = vector.extract_strided_slice %192 {offsets = [0, 32], sizes = [4, 16], strides = [1, 1]} : vector<4x64xf32> to vector<4x16xf32>
    %cst_43 = arith.constant 2.000000e+00 : f32
    %197 = vector.broadcast %cst_43 : f32 to vector<4x16xf32>
    %198 = arith.mulf %197, %196 : vector<4x16xf32>
    %cst_44 = arith.constant 1.000000e+00 : f32
    %199 = vector.broadcast %cst_44 : f32 to vector<4x16xf32>
    %200 = arith.subf %198, %199 : vector<4x16xf32>
    %201 = arith.mulf %194, %181 : vector<4x16xf32>
    %202 = arith.mulf %193, %200 : vector<4x16xf32>
    %203 = arith.addf %201, %202 : vector<4x16xf32>
    %204 = math.tanh %203 : vector<4x16xf32>
    %205 = arith.mulf %195, %204 : vector<4x16xf32>
    %206 = vector.extract_strided_slice %51 {offsets = [7, 0, 0], sizes = [1, 4, 64], strides = [1, 1, 1]} : vector<8x4x64xf32> to vector<1x4x64xf32>
    %207 = vector.shape_cast %206 : vector<1x4x64xf32> to vector<4x64xf32>
    %cst_45 = arith.constant dense<0.000000e+00> : vector<4x64xf32>
    %208 = tpu.matmul %205, %40, %cst_45 {dimension_numbers = #tpu.dot_dimension_numbers<[1], [0], [0], [1], [0, 0, 1, 1], [], []>} : vector<4x16xf32>, vector<16x64xf32>, vector<4x64xf32> -> vector<4x64xf32>
    %209 = arith.addf %207, %208 : vector<4x64xf32>
    %210 = arith.negf %209 : vector<4x64xf32>
    %211 = math.exp %210 : vector<4x64xf32>
    %cst_46 = arith.constant 1.000000e+00 : f32
    %212 = vector.broadcast %cst_46 : f32 to vector<4x64xf32>
    %213 = arith.addf %212, %211 : vector<4x64xf32>
    %214 = arith.divf %212, %213 : vector<4x64xf32>
    %215 = vector.extract_strided_slice %214 {offsets = [0, 0], sizes = [4, 16], strides = [1, 1]} : vector<4x64xf32> to vector<4x16xf32>
    %216 = vector.extract_strided_slice %214 {offsets = [0, 16], sizes = [4, 16], strides = [1, 1]} : vector<4x64xf32> to vector<4x16xf32>
    %217 = vector.extract_strided_slice %214 {offsets = [0, 48], sizes = [4, 16], strides = [1, 1]} : vector<4x64xf32> to vector<4x16xf32>
    %218 = vector.extract_strided_slice %214 {offsets = [0, 32], sizes = [4, 16], strides = [1, 1]} : vector<4x64xf32> to vector<4x16xf32>
    %cst_47 = arith.constant 2.000000e+00 : f32
    %219 = vector.broadcast %cst_47 : f32 to vector<4x16xf32>
    %220 = arith.mulf %219, %218 : vector<4x16xf32>
    %cst_48 = arith.constant 1.000000e+00 : f32
    %221 = vector.broadcast %cst_48 : f32 to vector<4x16xf32>
    %222 = arith.subf %220, %221 : vector<4x16xf32>
    %223 = arith.mulf %216, %203 : vector<4x16xf32>
    %224 = arith.mulf %215, %222 : vector<4x16xf32>
    %225 = arith.addf %223, %224 : vector<4x16xf32>
    %226 = math.tanh %225 : vector<4x16xf32>
    %227 = arith.mulf %217, %226 : vector<4x16xf32>
    %228 = vector.extract_strided_slice %1 {offsets = [0, 7], sizes = [4, 1], strides = [1, 1]} : vector<4x8xf32> to vector<4x1xf32>
    %c64 = arith.constant 64 : index
    %c0_49 = arith.constant 0 : index
    %229 = vector.load %arg2[%c64, %c0_49] : memref<120x128xf32, #tpu.memory_space<vmem>>, vector<16x40xf32>
    %cst_50 = arith.constant dense<0.000000e+00> : vector<4x40xf32>
    %230 = tpu.matmul %227, %229, %cst_50 {dimension_numbers = #tpu.dot_dimension_numbers<[1], [0], [0], [1], [0, 0, 1, 1], [], []>} : vector<4x16xf32>, vector<16x40xf32>, vector<4x40xf32> -> vector<4x40xf32>
    %231 = vector.extract_strided_slice %0 {offsets = [6, 0], sizes = [1, 40], strides = [1, 1]} : vector<16x128xf32> to vector<1x40xf32>
    %232 = vector.broadcast %228 : vector<4x1xf32> to vector<4x40xf32>
    %233 = vector.broadcast %231 : vector<1x40xf32> to vector<4x40xf32>
    %234 = arith.mulf %232, %233 : vector<4x40xf32>
    %235 = arith.addf %230, %234 : vector<4x40xf32>
    %236 = vector.extract_strided_slice %0 {offsets = [7, 0], sizes = [1, 40], strides = [1, 1]} : vector<16x128xf32> to vector<1x40xf32>
    %237 = vector.broadcast %236 : vector<1x40xf32> to vector<4x40xf32>
    %238 = arith.addf %235, %237 : vector<4x40xf32>
    %239 = vector.extract_strided_slice %0 {offsets = [8, 0], sizes = [1, 40], strides = [1, 1]} : vector<16x128xf32> to vector<1x40xf32>
    %240 = vector.extract_strided_slice %0 {offsets = [9, 0], sizes = [1, 40], strides = [1, 1]} : vector<16x128xf32> to vector<1x40xf32>
    %cst_51 = arith.constant dense<0.000000e+00> : vector<40xf32>
    %241 = vector.multi_reduction <add>, %238, %cst_51 [0] : vector<4x40xf32> to vector<40xf32>
    %242 = vector.shape_cast %241 : vector<40xf32> to vector<1x40xf32>
    %cst_52 = arith.constant 4.000000e+00 : f32
    %243 = vector.broadcast %cst_52 : f32 to vector<1x40xf32>
    %244 = arith.divf %242, %243 : vector<1x40xf32>
    %245 = vector.broadcast %244 : vector<1x40xf32> to vector<4x40xf32>
    %246 = arith.subf %238, %245 : vector<4x40xf32>
    %247 = arith.mulf %246, %246 : vector<4x40xf32>
    %cst_53 = arith.constant dense<0.000000e+00> : vector<40xf32>
    %248 = vector.multi_reduction <add>, %247, %cst_53 [0] : vector<4x40xf32> to vector<40xf32>
    %249 = vector.shape_cast %248 : vector<40xf32> to vector<1x40xf32>
    %cst_54 = arith.constant 4.000000e+00 : f32
    %250 = vector.broadcast %cst_54 : f32 to vector<1x40xf32>
    %251 = arith.divf %249, %250 : vector<1x40xf32>
    %252 = vector.broadcast %244 : vector<1x40xf32> to vector<4x40xf32>
    %253 = arith.subf %238, %252 : vector<4x40xf32>
    %cst_55 = arith.constant 9.99999974E-6 : f32
    %254 = vector.broadcast %cst_55 : f32 to vector<1x40xf32>
    %255 = arith.addf %251, %254 : vector<1x40xf32>
    %256 = math.rsqrt %255 : vector<1x40xf32>
    %257 = vector.broadcast %256 : vector<1x40xf32> to vector<4x40xf32>
    %258 = arith.mulf %253, %257 : vector<4x40xf32>
    %259 = vector.broadcast %239 : vector<1x40xf32> to vector<4x40xf32>
    %260 = arith.mulf %258, %259 : vector<4x40xf32>
    %261 = vector.broadcast %240 : vector<1x40xf32> to vector<4x40xf32>
    %262 = arith.addf %260, %261 : vector<4x40xf32>
    %cst_56 = arith.constant 0.000000e+00 : f32
    %263 = vector.broadcast %cst_56 : f32 to vector<4x40xf32>
    %264 = arith.maximumf %262, %263 : vector<4x40xf32>
    %c80 = arith.constant 80 : index
    %c0_57 = arith.constant 0 : index
    %265 = vector.load %arg2[%c80, %c0_57] : memref<120x128xf32, #tpu.memory_space<vmem>>, vector<40x1xf32>
    %cst_58 = arith.constant dense<0.000000e+00> : vector<4x1xf32>
    %266 = tpu.matmul %264, %265, %cst_58 {dimension_numbers = #tpu.dot_dimension_numbers<[1], [0], [0], [1], [0, 0, 1, 1], [], []>} : vector<4x40xf32>, vector<40x1xf32>, vector<4x1xf32> -> vector<4x1xf32>
    %267 = vector.extract_strided_slice %0 {offsets = [10, 0], sizes = [1, 1], strides = [1, 1]} : vector<16x128xf32> to vector<1x1xf32>
    %268 = vector.broadcast %267 : vector<1x1xf32> to vector<4x1xf32>
    %269 = arith.addf %266, %268 : vector<4x1xf32>
    %c0_59 = arith.constant 0 : index
    %c0_60 = arith.constant 0 : index
    %270 = vector.load %arg4[%c0_59, %c0_60] : memref<4x1xf32, #tpu.memory_space<vmem>>, vector<4x1xf32>
    tpu.vector_store %arg4[%c0_59, %c0_60], %269 {strides = array<i32>} : memref<4x1xf32, #tpu.memory_space<vmem>>, vector<4x1xf32>,
    return
  }
}

</mosaic_0001>

<llo_original>
// kernel: tpu_custom_call.1
$region0: #{tpu_custom_call.1}
  #allocation0 [shape = 'u32[]', space=smem, size = 0x4, offset = 0x4, fixed_abs, tag = 'smem constant byte address 0x4 - core index']
  #allocation1 [shape = 'u32[144,128]{1,0:T(1,128)}', space=vmem, size = 0x12000, scoped, tag = 'internal scratch']
  %s0 = inlined_call_operand.hbm [shape: f32[4,8], index: 0, kind: input, shape index: {}]
  %s1 = inlined_call_operand.hbm [shape: f32[4,8], index: 1, kind: input, shape index: {}]
  %s2 = inlined_call_operand.hbm [shape: f32[120,128], index: 2, kind: input, shape index: {}]
  %s3 = inlined_call_operand.hbm [shape: f32[16,128], index: 3, kind: input, shape index: {}]
  %s4 = inlined_call_operand.vmem [shape: f32[4,1], index: 4, kind: output, shape index: {}]
  %s5 = sld [smem:[#allocation0]]
  $region42: #{tpu_custom_call.1} parent=0
    _
  %s7 = ssub.s32 1, %s5
  %s8 = scalar_select 0, %s7, %s5
  $region1: #{tpu_custom_call.1} parent=0
    #allocation2 [shape = 'u8[2048]{0}', space=vmem, size = 0x800, scoped, tag = 'input window, operand 0, single buffered']
    #allocation3 [shape = 's32[1]{0}', space=sflag, size = 0x4, scoped, tag = 'scoped memory for tpu_custom_call.1']
    #allocation4 [shape = 'u8[2048]{0}', space=vmem, size = 0x800, scoped, tag = 'input window, operand 1, single buffered']
    #allocation5 [shape = 's32[1]{0}', space=sflag, size = 0x4, scoped, tag = 'scoped memory for tpu_custom_call.1']
    #allocation6 [shape = 'u8[61440]{0}', space=vmem, size = 0xf000, scoped, tag = 'input window, operand 2, single buffered']
    #allocation7 [shape = 'u8[8192]{0}', space=vmem, size = 0x2000, scoped, tag = 'input window, operand 3, single buffered']
    #allocation8 [shape = 's32[1]{0}', space=sflag, size = 0x4, scoped, tag = 'scoped memory for tpu_custom_call.1']
    %9 = vsyncpa [#allocation3], 0
    %10 = vsyncpa [#allocation5], 0
    %11 = vsyncpa [#allocation8], 0
    // Predicated region
    $region2: #{tpu_custom_call.1} parent=1 // pred_check
      _
    $region3: #{tpu_custom_call.1} parent=1 // pred_check_branch
      %13 = sbr.rel (0) target = $region5
    $region4: #{tpu_custom_call.1} parent=1 // pred_region
      %s15 = ssub.s32 64, 64
      %16 = vsyncadd [#allocation3], %s15
      %s18 = sshll.u32 [#allocation2], 4
      %s19 = int_to_ptr.vmem [resolvable:$true] %s18
      %21 = dma.hbm_to_vmem [thread:$0]  %s0, 64, %s19, [#allocation3]
    $region5: #{tpu_custom_call.1} parent=1 // pred_fallthru
      _
    // Predicated region
    $region6: #{tpu_custom_call.1} parent=1 // pred_check
      _
    $region7: #{tpu_custom_call.1} parent=1 // pred_check_branch
      %23 = sbr.rel (0) target = $region9
    $region8: #{tpu_custom_call.1} parent=1 // pred_region
      %s25 = ssub.s32 64, 64
      %26 = vsyncadd [#allocation5], %s25
      %s28 = sshll.u32 [#allocation4], 4
      %s29 = int_to_ptr.vmem [resolvable:$true] %s28
      %31 = dma.hbm_to_vmem [thread:$0]  %s1, 64, %s29, [#allocation5]
    $region9: #{tpu_custom_call.1} parent=1 // pred_fallthru
      _
    // Predicated region
    $region10: #{tpu_custom_call.1} parent=1 // pred_check
      _
    $region11: #{tpu_custom_call.1} parent=1 // pred_check_branch
      %33 = sbr.rel (0) target = $region13
    $region12: #{tpu_custom_call.1} parent=1 // pred_region
      %s35 = ssub.s32 1920, 1920
      %36 = vsyncadd [#allocation5], %s35
      %s37 = sshll.u32 [#allocation6], 4
      %s38 = int_to_ptr.vmem [resolvable:$true] %s37
      %43 = dma.hbm_to_vmem [thread:$0]  %s2, 1920, %s38, [#allocation5], 128, 128, 8
    $region13: #{tpu_custom_call.1} parent=1 // pred_fallthru
      _
    // Predicated region
    $region14: #{tpu_custom_call.1} parent=1 // pred_check
      _
    $region15: #{tpu_custom_call.1} parent=1 // pred_check_branch
      %45 = sbr.rel (0) target = $region17
    $region16: #{tpu_custom_call.1} parent=1 // pred_region
      %s47 = ssub.s32 256, 256
      %48 = vsyncadd [#allocation8], %s47
      %s49 = sshll.u32 [#allocation7], 4
      %s50 = int_to_ptr.vmem [resolvable:$true] %s49
      %55 = dma.hbm_to_vmem [thread:$0]  %s3, 256, %s50, [#allocation8], 128, 128, 8
    $region17: #{tpu_custom_call.1} parent=1 // pred_fallthru
      _
    // Predicated region
    $region18: #{tpu_custom_call.1} parent=1 // pred_check
      _
    $region19: #{tpu_custom_call.1} parent=1 // pred_check_branch
      %57 = sbr.rel (0) target = $region21
    $region20: #{tpu_custom_call.1} parent=1 // pred_region
      %58 = dma.done [#allocation3], 64
    $region21: #{tpu_custom_call.1} parent=1 // pred_fallthru
      _
    // Predicated region
    $region22: #{tpu_custom_call.1} parent=1 // pred_check
      _
    $region23: #{tpu_custom_call.1} parent=1 // pred_check_branch
      %60 = sbr.rel (0) target = $region25
    $region24: #{tpu_custom_call.1} parent=1 // pred_region
      %61 = dma.done [#allocation5], 64
    $region25: #{tpu_custom_call.1} parent=1 // pred_fallthru
      _
    // Predicated region
    $region26: #{tpu_custom_call.1} parent=1 // pred_check
      _
    $region27: #{tpu_custom_call.1} parent=1 // pred_check_branch
      %63 = sbr.rel (0) target = $region29
    $region28: #{tpu_custom_call.1} parent=1 // pred_region
      %64 = dma.done [#allocation5], 1920
    $region29: #{tpu_custom_call.1} parent=1 // pred_fallthru
      _
    // Predicated region
    $region30: #{tpu_custom_call.1} parent=1 // pred_check
      _
    $region31: #{tpu_custom_call.1} parent=1 // pred_check_branch
      %66 = sbr.rel (0) target = $region33
    $region32: #{tpu_custom_call.1} parent=1 // pred_region
      %67 = dma.done [#allocation8], 256
    $region33: #{tpu_custom_call.1} parent=1 // pred_fallthru
      _
    %v68 = vld [vmem:[#allocation7] sm:$0xff]
    %v69 = vld [vmem:[#allocation7 + $0x8] sm:$0xff]
    %v70 = vld [vmem:[#allocation2] sm:$0xf]
    %v71 = vld [vmem:[#allocation4] sm:$0xf]
    %v72 = vld [vmem:[#allocation6] sm:$0xff]
    %v73 = vlaneseq
    %v74 = vshrl.u32 %v73, 7
    %v75 = vsub.s32 0, %v74
    %v76 = vrot.slane %v68, %v75
    %vm77 = vcmask 64512
    %v79 = vsel %vm77, %v71, 0
    %81 = vmatprep.subr.mxu0 0.0
    %82 = vmatpush1.msra.mxu0 0.0
    %83 = vmatprep.subr.mxu0 0.0
    %84 = vmatpush1.msra.mxu0 0.0
    %85 = vmatprep.subr.mxu0 0.0
    %86 = vmatpush1.msra.mxu0 0.0
    %87 = vmatprep.subr.mxu0 0.0
    %88 = vmatpush1.msra.mxu0 0.0
    %89 = vmatprep.subr.mxu0 0.0
    %90 = vmatpush1.msra.mxu0 0.0
    %91 = vmatprep.subr.mxu0 0.0
    %92 = vmatpush1.msra.mxu0 0.0
    %93 = vmatprep.subr.mxu0 0.0
    %94 = vmatpush1.msra.mxu0 0.0
    %95 = vmatprep.subr.mxu0 0.0
    %96 = vmatpush1.msra.mxu0 0.0
    %97 = vmatprep.subr.mxu0 0.0
    %98 = vmatpush1.msra.mxu0 0.0
    %99 = vmatprep.subr.mxu0 0.0
    %100 = vmatpush1.msra.mxu0 0.0
    %101 = vmatprep.subr.mxu0 0.0
    %102 = vmatpush1.msra.mxu0 0.0
    %103 = vmatprep.subr.mxu0 0.0
    %104 = vmatpush1.msra.mxu0 0.0
    %105 = vmatprep.subr.mxu0 0.0
    %106 = vmatpush1.msra.mxu0 0.0
    %107 = vmatprep.subr.mxu0 0.0
    %108 = vmatpush1.msra.mxu0 0.0
    %109 = vmatprep.subr.mxu0 0.0
    %110 = vmatpush1.msra.mxu0 0.0
    %111 = vmatprep.subr.mxu0 0.0
    %112 = vmatpush1.msra.mxu0 %v72
    %113 = vmatprep.subr.mxu0 0.0
    %114 = vmatpush2.msra.mxu0 0.0
    %115 = vmatprep.subr.mxu0 0.0
    %116 = vmatpush2.msra.mxu0 0.0
    %117 = vmatprep.subr.mxu0 0.0
    %118 = vmatpush2.msra.mxu0 0.0
    %119 = vmatprep.subr.mxu0 0.0
    %120 = vmatpush2.msra.mxu0 0.0
    %121 = vmatprep.subr.mxu0 0.0
    %122 = vmatpush2.msra.mxu0 0.0
    %123 = vmatprep.subr.mxu0 0.0
    %124 = vmatpush2.msra.mxu0 0.0
    %125 = vmatprep.subr.mxu0 0.0
    %126 = vmatpush2.msra.mxu0 0.0
    %127 = vmatprep.subr.mxu0 0.0
    %128 = vmatpush2.msra.mxu0 0.0
    %129 = vmatprep.subr.mxu0 0.0
    %130 = vmatpush2.msra.mxu0 0.0
    %131 = vmatprep.subr.mxu0 0.0
    %132 = vmatpush2.msra.mxu0 0.0
    %133 = vmatprep.subr.mxu0 0.0
    %134 = vmatpush2.msra.mxu0 0.0
    %135 = vmatprep.subr.mxu0 0.0
    %136 = vmatpush2.msra.mxu0 0.0
    %137 = vmatprep.subr.mxu0 0.0
    %138 = vmatpush2.msra.mxu0 0.0
    %139 = vmatprep.subr.mxu0 0.0
    %140 = vmatpush2.msra.mxu0 0.0
    %141 = vmatprep.subr.mxu0 0.0
    %142 = vmatpush2.msra.mxu0 0.0
    %143 = vmatprep.subr.mxu0 0.0
    %144 = vmatpush2.msra.mxu0 0.0
    %145 = vmatprep.mubr.f32.mxu0 0.0
    %146 = vmatmul.mubr.f32.gmra.mxu0 %v79
    %v147 = vpop.f32.mrf.mxu0
    %v148 = vadd.f32 %v76, %v147
    %v149 = vpop.f32.mrf.mxu0
    %150 = vdwg.mxu0
    %vm151 = vcmask 322560
    %v152 = vsel %vm151, %v148, 0.0
    %v153 = vrot.slane %v152, 4
    %v154 = vadd.f32 %v152, %v153
    %v155 = vrot.slane %v154, 2
    %v156 = vadd.f32 %v154, %v155
    %v157 = vrot.slane %v156, 1
    %v158 = vadd.f32 %v156, %v157
    %v159 = vrcp.pop 4.0
    %v160 = vmul.f32 %v158, %v159
    %v161 = vsub.f32 %v148, %v160
    %v162 = vmul.f32 %v161, %v161
    %v163 = vsel %vm151, %v162, 0.0
    %v164 = vrot.slane %v163, 4
    %v165 = vadd.f32 %v163, %v164
    %v166 = vrot.slane %v165, 2
    %v167 = vadd.f32 %v165, %v166
    %v168 = vrot.slane %v167, 1
    %v169 = vadd.f32 %v167, %v168
    %v170 = vmul.f32 %v169, %v159
    %v171 = vadd.f32 %v170, 1e-05
    %v172 = vrsqrt.pop %v171
    %v173 = vmul.f32 %v161, %v172
    %v174 = vlaneseq
    %v175 = vshrl.u32 %v174, 7
    %v176 = vsub.s32 1, %v175
    %v177 = vrot.slane %v68, %v176
    %v178 = vmul.f32 %v173, %v177
    %v179 = vlaneseq
    %v180 = vshrl.u32 %v179, 7
    %v181 = vsub.s32 2, %v180
    %v182 = vrot.slane %v68, %v181
    %v183 = vadd.f32 %v178, %v182
    %v184 = vmax.f32 %v183, 0.0
    %v185 = vld [vmem:[#allocation6 + $0x8] sm:$0xff]
    %v186 = vld [vmem:[#allocation6 + $0x10] sm:$0xff]
    %v187 = vld [vmem:[#allocation6 + $0x18] sm:$0xff]
    %v188 = vld [vmem:[#allocation6 + $0x20] sm:$0xff]
    %v189 = vld [vmem:[#allocation6 + $0x28] sm:$0xff]
    %v190 = vlaneseq
    %v191 = vshrl.u32 %v190, 7
    %v192 = vsub.s32 3, %v191
    %v193 = vrot.slane %v68, %v192
    %vm194 = vcmask 326656
    %v196 = vsel %vm194, %v184, 0
    %198 = vmatprep.subr.mxu0 0.0
    %199 = vmatpush1.msra.mxu0 0.0
    %200 = vmatprep.subr.mxu0 0.0
    %201 = vmatpush1.msra.mxu0 0.0
    %202 = vmatprep.subr.mxu0 0.0
    %203 = vmatpush1.msra.mxu0 0.0
    %204 = vmatprep.subr.mxu0 0.0
    %205 = vmatpush1.msra.mxu0 0.0
    %206 = vmatprep.subr.mxu0 0.0
    %207 = vmatpush1.msra.mxu0 0.0
    %208 = vmatprep.subr.mxu0 0.0
    %209 = vmatpush1.msra.mxu0 0.0
    %210 = vmatprep.subr.mxu0 0.0
    %211 = vmatpush1.msra.mxu0 0.0
    %212 = vmatprep.subr.mxu0 0.0
    %213 = vmatpush1.msra.mxu0 0.0
    %214 = vmatprep.subr.mxu0 0.0
    %215 = vmatpush1.msra.mxu0 0.0
    %216 = vmatprep.subr.mxu0 0.0
    %217 = vmatpush1.msra.mxu0 0.0
    %218 = vmatprep.subr.mxu0 0.0
    %219 = vmatpush1.msra.mxu0 0.0
    %220 = vmatprep.subr.mxu0 0.0
    %221 = vmatpush1.msra.mxu0 %v189
    %222 = vmatprep.subr.mxu0 0.0
    %223 = vmatpush1.msra.mxu0 %v188
    %224 = vmatprep.subr.mxu0 0.0
    %225 = vmatpush1.msra.mxu0 %v187
    %226 = vmatprep.subr.mxu0 0.0
    %227 = vmatpush1.msra.mxu0 %v186
    %228 = vmatprep.subr.mxu0 0.0
    %229 = vmatpush1.msra.mxu0 %v185
    %230 = vmatprep.subr.mxu0 0.0
    %231 = vmatpush2.msra.mxu0 0.0
    %232 = vmatprep.subr.mxu0 0.0
    %233 = vmatpush2.msra.mxu0 0.0
    %234 = vmatprep.subr.mxu0 0.0
    %235 = vmatpush2.msra.mxu0 0.0
    %236 = vmatprep.subr.mxu0 0.0
    %237 = vmatpush2.msra.mxu0 0.0
    %238 = vmatprep.subr.mxu0 0.0
    %239 = vmatpush2.msra.mxu0 0.0
    %240 = vmatprep.subr.mxu0 0.0
    %241 = vmatpush2.msra.mxu0 0.0
    %242 = vmatprep.subr.mxu0 0.0
    %243 = vmatpush2.msra.mxu0 0.0
    %244 = vmatprep.subr.mxu0 0.0
    %245 = vmatpush2.msra.mxu0 0.0
    %246 = vmatprep.subr.mxu0 0.0
    %247 = vmatpush2.msra.mxu0 0.0
    %248 = vmatprep.subr.mxu0 0.0
    %249 = vmatpush2.msra.mxu0 0.0
    %250 = vmatprep.subr.mxu0 0.0
    %251 = vmatpush2.msra.mxu0 0.0
    %252 = vmatprep.subr.mxu0 0.0
    %253 = vmatpush2.msra.mxu0 0.0
    %254 = vmatprep.subr.mxu0 0.0
    %255 = vmatpush2.msra.mxu0 0.0
    %256 = vmatprep.subr.mxu0 0.0
    %257 = vmatpush2.msra.mxu0 0.0
    %258 = vmatprep.subr.mxu0 0.0
    %259 = vmatpush2.msra.mxu0 0.0
    %260 = vmatprep.subr.mxu0 0.0
    %261 = vmatpush2.msra.mxu0 0.0
    %262 = vmatprep.mubr.f32.mxu0 0.0
    %263 = vmatmul.mubr.f32.gmra.mxu0 %v196
    %v264 = vpop.f32.mrf.mxu0
    %v265 = vadd.f32 %v193, %v264
    %v266 = vpop.f32.mrf.mxu0
    %267 = vdwg.mxu0
    %v268 = vld [vmem:[#allocation6 + $0x30] sm:$0xff]
    %v269 = vld [vmem:[#allocation6 + $0x38] sm:$0xff]
    %270 = vxpose.xlu0.b32.start [1/16] %v70, 128
    %271 = vxpose.xlu0.b32.cont [2/16] 0.0, 128
    %272 = vxpose.xlu0.b32.cont [3/16] 0.0, 128
    %273 = vxpose.xlu0.b32.cont [4/16] 0.0, 128
    %274 = vxpose.xlu0.b32.cont [5/16] 0.0, 128
    %275 = vxpose.xlu0.b32.cont [6/16] 0.0, 128
    %276 = vxpose.xlu0.b32.cont [7/16] 0.0, 128
    %277 = vxpose.xlu0.b32.cont [8/16] 0.0, 128
    %278 = vxpose.xlu0.b32.cont [9/16] 0.0, 128
    %279 = vxpose.xlu0.b32.cont [10/16] 0.0, 128
    %280 = vxpose.xlu0.b32.cont [11/16] 0.0, 128
    %281 = vxpose.xlu0.b32.cont [12/16] 0.0, 128
    %282 = vxpose.xlu0.b32.cont [13/16] 0.0, 128
    %283 = vxpose.xlu0.b32.cont [14/16] 0.0, 128
    %284 = vxpose.xlu0.b32.cont [15/16] 0.0, 128
    %285 = vxpose.xlu0.b32.end [16/16] 0.0, 128
    %v286 = vpop.trf.xlu0
    %v287 = vpop.trf.xlu0
    %v288 = vpop.trf.xlu0
    %v289 = vpop.trf.xlu0
    %v290 = vpop.trf.xlu0
    %v291 = vpop.trf.xlu0
    %v292 = vpop.trf.xlu0
    %v293 = vpop.trf.xlu0
    %v294 = vpop.trf.xlu0
    %v295 = vpop.trf.xlu0
    %v296 = vpop.trf.xlu0
    %v297 = vpop.trf.xlu0
    %v298 = vpop.trf.xlu0
    %v299 = vpop.trf.xlu0
    %v300 = vpop.trf.xlu0
    %v301 = vpop.trf.xlu0
    %v302 = vlaneseq
    %v303 = vshrl.u32 %v302, 7
    %v304 = vsub.s32 0, %v303
    %v305 = vrot.slane %v286, %v304
    %307 = vbcast.lane.b32.xlu0 %v305, 256
    %v308 = vpop.permute.xlu0 %307
    %v309 = vlaneseq
    %v310 = vshrl.u32 %v309, 7
    %v311 = vsub.s32 1, %v310
    %v312 = vrot.slane %v286, %v311
    %314 = vbcast.lane.b32.xlu0 %v312, 256
    %v315 = vpop.permute.xlu0 %314
    %v316 = vlaneseq
    %v317 = vshrl.u32 %v316, 7
    %v318 = vsub.s32 2, %v317
    %v319 = vrot.slane %v286, %v318
    %321 = vbcast.lane.b32.xlu0 %v319, 256
    %v322 = vpop.permute.xlu0 %321
    %v323 = vlaneseq
    %v324 = vshrl.u32 %v323, 7
    %v325 = vsub.s32 3, %v324
    %v326 = vrot.slane %v286, %v325
    %328 = vbcast.lane.b32.xlu0 %v326, 256
    %v329 = vpop.permute.xlu0 %328
    %v330 = vlaneseq
    %v331 = vshrl.u32 %v330, 7
    %v332 = vsub.s32 4, %v331
    %v333 = vrot.slane %v286, %v332
    %335 = vbcast.lane.b32.xlu0 %v333, 256
    %v336 = vpop.permute.xlu0 %335
    %v337 = vlaneseq
    %v338 = vshrl.u32 %v337, 7
    %v339 = vsub.s32 5, %v338
    %v340 = vrot.slane %v286, %v339
    %342 = vbcast.lane.b32.xlu0 %v340, 256
    %v343 = vpop.permute.xlu0 %342
    %v344 = vlaneseq
    %v345 = vshrl.u32 %v344, 7
    %v346 = vsub.s32 6, %v345
    %v347 = vrot.slane %v286, %v346
    %349 = vbcast.lane.b32.xlu0 %v347, 256
    %v350 = vpop.permute.xlu0 %349
    %v351 = vlaneseq
    %v352 = vshrl.u32 %v351, 7
    %v353 = vsub.s32 7, %v352
    %v354 = vrot.slane %v286, %v353
    %356 = vbcast.lane.b32.xlu0 %v354, 256
    %v357 = vpop.permute.xlu0 %356
    %v358 = vlaneseq
    %v359 = vshrl.u32 %v358, 7
    %v360 = vsub.s32 4, %v359
    %v361 = vrot.slane %v68, %v360
    %v362 = vmul.f32 %v308, %v361
    %v363 = vmul.f32 %v315, %v361
    %v364 = vmul.f32 %v322, %v361
    %v365 = vmul.f32 %v329, %v361
    %v366 = vmul.f32 %v336, %v361
    %v367 = vmul.f32 %v343, %v361
    %v368 = vmul.f32 %v350, %v361
    %v369 = vmul.f32 %v357, %v361
    %v370 = vlaneseq
    %v371 = vshrl.u32 %v370, 7
    %v372 = vsub.s32 5, %v371
    %v373 = vrot.slane %v68, %v372
    %v374 = vadd.f32 %v362, %v373
    %v375 = vadd.f32 %v363, %v373
    %v376 = vadd.f32 %v364, %v373
    %v377 = vadd.f32 %v365, %v373
    %v378 = vadd.f32 %v366, %v373
    %v379 = vadd.f32 %v367, %v373
    %v380 = vadd.f32 %v368, %v373
    %v381 = vadd.f32 %v369, %v373
    %vm382 = vcmask 130048
    %v384 = vsel %vm382, %v265, 0
    %386 = vmatprep.subr.mxu0 0.0
    %387 = vmatpush1.msra.mxu0 0.0
    %388 = vmatprep.subr.mxu0 0.0
    %389 = vmatpush1.msra.mxu0 0.0
    %390 = vmatprep.subr.mxu0 0.0
    %391 = vmatpush1.msra.mxu0 0.0
    %392 = vmatprep.subr.mxu0 0.0
    %393 = vmatpush1.msra.mxu0 0.0
    %394 = vmatprep.subr.mxu0 0.0
    %395 = vmatpush1.msra.mxu0 0.0
    %396 = vmatprep.subr.mxu0 0.0
    %397 = vmatpush1.msra.mxu0 0.0
    %398 = vmatprep.subr.mxu0 0.0
    %399 = vmatpush1.msra.mxu0 0.0
    %400 = vmatprep.subr.mxu0 0.0
    %401 = vmatpush1.msra.mxu0 0.0
    %402 = vmatprep.subr.mxu0 0.0
    %403 = vmatpush1.msra.mxu0 0.0
    %404 = vmatprep.subr.mxu0 0.0
    %405 = vmatpush1.msra.mxu0 0.0
    %406 = vmatprep.subr.mxu0 0.0
    %407 = vmatpush1.msra.mxu0 0.0
    %408 = vmatprep.subr.mxu0 0.0
    %409 = vmatpush1.msra.mxu0 0.0
    %410 = vmatprep.subr.mxu0 0.0
    %411 = vmatpush1.msra.mxu0 0.0
    %412 = vmatprep.subr.mxu0 0.0
    %413 = vmatpush1.msra.mxu0 0.0
    %414 = vmatprep.subr.mxu0 0.0
    %415 = vmatpush1.msra.mxu0 %v269
    %416 = vmatprep.subr.mxu0 0.0
    %417 = vmatpush1.msra.mxu0 %v268
    %418 = vmatprep.subr.mxu0 0.0
    %419 = vmatpush2.msra.mxu0 0.0
    %420 = vmatprep.subr.mxu0 0.0
    %421 = vmatpush2.msra.mxu0 0.0
    %422 = vmatprep.subr.mxu0 0.0
    %423 = vmatpush2.msra.mxu0 0.0
    %424 = vmatprep.subr.mxu0 0.0
    %425 = vmatpush2.msra.mxu0 0.0
    %426 = vmatprep.subr.mxu0 0.0
    %427 = vmatpush2.msra.mxu0 0.0
    %428 = vmatprep.subr.mxu0 0.0
    %429 = vmatpush2.msra.mxu0 0.0
    %430 = vmatprep.subr.mxu0 0.0
    %431 = vmatpush2.msra.mxu0 0.0
    %432 = vmatprep.subr.mxu0 0.0
    %433 = vmatpush2.msra.mxu0 0.0
    %434 = vmatprep.subr.mxu0 0.0
    %435 = vmatpush2.msra.mxu0 0.0
    %436 = vmatprep.subr.mxu0 0.0
    %437 = vmatpush2.msra.mxu0 0.0
    %438 = vmatprep.subr.mxu0 0.0
    %439 = vmatpush2.msra.mxu0 0.0
    %440 = vmatprep.subr.mxu0 0.0
    %441 = vmatpush2.msra.mxu0 0.0
    %442 = vmatprep.subr.mxu0 0.0
    %443 = vmatpush2.msra.mxu0 0.0
    %444 = vmatprep.subr.mxu0 0.0
    %445 = vmatpush2.msra.mxu0 0.0
    %446 = vmatprep.subr.mxu0 0.0
    %447 = vmatpush2.msra.mxu0 0.0
    %448 = vmatprep.subr.mxu0 0.0
    %449 = vmatpush2.msra.mxu0 0.0
    %450 = vmatprep.mubr.f32.mxu0 0.0
    %451 = vmatmul.mubr.f32.gmra.mxu0 %v384
    %v452 = vpop.f32.mrf.mxu0
    %v453 = vadd.f32 0.0, %v452
    %v454 = vpop.f32.mrf.mxu0
    %455 = vdwg.mxu0
    %v456 = vadd.f32 %v374, %v453
    %v457 = vxor.u32 %v456, 2147483648
    %v458 = vmul.f32 %v457, 1.442695
    %v459 = vpow.pop %v458
    %v460 = vadd.f32 %v459, 1.0
    %v461 = vrcp.pop %v460
    %v462 = vmul.f32 1.0, %v461
    %v463 = vmul.f32 %v462, 2.0
    %v464 = vsub.f32 %v463, 1.0
    %v465 = vmul.f32 %v462, 0.0
    %467 = vrot.lane.b32.xlu0 %v464, 96
    %v468 = vpop.permute.xlu0 %467
    %v470 = vmul.f32 %v462, %v468
    %472 = vrot.lane.b32.xlu0 %v470, 16
    %v473 = vpop.permute.xlu0 %472
    %v475 = vadd.f32 %v465, %v473
    %v476 = vtanh.pop %v475
    %478 = vrot.lane.b32.xlu0 %v476, 32
    %v479 = vpop.permute.xlu0 %478
    %v481 = vmul.f32 %v462, %v479
    %483 = vrot.lane.b32.xlu0 %v481, 80
    %v484 = vpop.permute.xlu0 %483
    %v485 = vsel %vm382, %v484, 0
    %487 = vmatprep.subr.mxu0 0.0
    %488 = vmatpush1.msra.mxu0 0.0
    %489 = vmatprep.subr.mxu0 0.0
    %490 = vmatpush1.msra.mxu0 0.0
    %491 = vmatprep.subr.mxu0 0.0
    %492 = vmatpush1.msra.mxu0 0.0
    %493 = vmatprep.subr.mxu0 0.0
    %494 = vmatpush1.msra.mxu0 0.0
    %495 = vmatprep.subr.mxu0 0.0
    %496 = vmatpush1.msra.mxu0 0.0
    %497 = vmatprep.subr.mxu0 0.0
    %498 = vmatpush1.msra.mxu0 0.0
    %499 = vmatprep.subr.mxu0 0.0
    %500 = vmatpush1.msra.mxu0 0.0
    %501 = vmatprep.subr.mxu0 0.0
    %502 = vmatpush1.msra.mxu0 0.0
    %503 = vmatprep.subr.mxu0 0.0
    %504 = vmatpush1.msra.mxu0 0.0
    %505 = vmatprep.subr.mxu0 0.0
    %506 = vmatpush1.msra.mxu0 0.0
    %507 = vmatprep.subr.mxu0 0.0
    %508 = vmatpush1.msra.mxu0 0.0
    %509 = vmatprep.subr.mxu0 0.0
    %510 = vmatpush1.msra.mxu0 0.0
    %511 = vmatprep.subr.mxu0 0.0
    %512 = vmatpush1.msra.mxu0 0.0
    %513 = vmatprep.subr.mxu0 0.0
    %514 = vmatpush1.msra.mxu0 0.0
    %515 = vmatprep.subr.mxu0 0.0
    %516 = vmatpush1.msra.mxu0 %v269
    %517 = vmatprep.subr.mxu0 0.0
    %518 = vmatpush1.msra.mxu0 %v268
    %519 = vmatprep.subr.mxu0 0.0
    %520 = vmatpush2.msra.mxu0 0.0
    %521 = vmatprep.subr.mxu0 0.0
    %522 = vmatpush2.msra.mxu0 0.0
    %523 = vmatprep.subr.mxu0 0.0
    %524 = vmatpush2.msra.mxu0 0.0
    %525 = vmatprep.subr.mxu0 0.0
    %526 = vmatpush2.msra.mxu0 0.0
    %527 = vmatprep.subr.mxu0 0.0
    %528 = vmatpush2.msra.mxu0 0.0
    %529 = vmatprep.subr.mxu0 0.0
    %530 = vmatpush2.msra.mxu0 0.0
    %531 = vmatprep.subr.mxu0 0.0
    %532 = vmatpush2.msra.mxu0 0.0
    %533 = vmatprep.subr.mxu0 0.0
    %534 = vmatpush2.msra.mxu0 0.0
    %535 = vmatprep.subr.mxu0 0.0
    %536 = vmatpush2.msra.mxu0 0.0
    %537 = vmatprep.subr.mxu0 0.0
    %538 = vmatpush2.msra.mxu0 0.0
    %539 = vmatprep.subr.mxu0 0.0
    %540 = vmatpush2.msra.mxu0 0.0
    %541 = vmatprep.subr.mxu0 0.0
    %542 = vmatpush2.msra.mxu0 0.0
    %543 = vmatprep.subr.mxu0 0.0
    %544 = vmatpush2.msra.mxu0 0.0
    %545 = vmatprep.subr.mxu0 0.0
    %546 = vmatpush2.msra.mxu0 0.0
    %547 = vmatprep.subr.mxu0 0.0
    %548 = vmatpush2.msra.mxu0 0.0
    %549 = vmatprep.subr.mxu0 0.0
    %550 = vmatpush2.msra.mxu0 0.0
    %551 = vmatprep.mubr.f32.mxu0 0.0
    %552 = vmatmul.mubr.f32.gmra.mxu0 %v485
    %v553 = vpop.f32.mrf.mxu0
    %v554 = vadd.f32 0.0, %v553
    %v555 = vpop.f32.mrf.mxu0
    %556 = vdwg.mxu0
    %v557 = vadd.f32 %v375, %v554
    %v558 = vxor.u32 %v557, 2147483648
    %v559 = vmul.f32 %v558, 1.442695
    %v560 = vpow.pop %v559
    %v561 = vadd.f32 %v560, 1.0
    %v562 = vrcp.pop %v561
    %v563 = vmul.f32 1.0, %v562
    %v564 = vmul.f32 %v563, 2.0
    %v565 = vsub.f32 %v564, 1.0
    %v566 = vmul.f32 %v563, %v475
    %568 = vrot.lane.b32.xlu0 %v565, 96
    %v569 = vpop.permute.xlu0 %568
    %v571 = vmul.f32 %v563, %v569
    %573 = vrot.lane.b32.xlu0 %v571, 16
    %v574 = vpop.permute.xlu0 %573
    %v576 = vadd.f32 %v566, %v574
    %v577 = vtanh.pop %v576
    %579 = vrot.lane.b32.xlu0 %v577, 32
    %v580 = vpop.permute.xlu0 %579
    %v582 = vmul.f32 %v563, %v580
    %584 = vrot.lane.b32.xlu0 %v582, 80
    %v585 = vpop.permute.xlu0 %584
    %v586 = vsel %vm382, %v585, 0
    %588 = vmatprep.subr.mxu0 0.0
    %589 = vmatpush1.msra.mxu0 0.0
    %590 = vmatprep.subr.mxu0 0.0
    %591 = vmatpush1.msra.mxu0 0.0
    %592 = vmatprep.subr.mxu0 0.0
    %593 = vmatpush1.msra.mxu0 0.0
    %594 = vmatprep.subr.mxu0 0.0
    %595 = vmatpush1.msra.mxu0 0.0
    %596 = vmatprep.subr.mxu0 0.0
    %597 = vmatpush1.msra.mxu0 0.0
    %598 = vmatprep.subr.mxu0 0.0
    %599 = vmatpush1.msra.mxu0 0.0
    %600 = vmatprep.subr.mxu0 0.0
    %601 = vmatpush1.msra.mxu0 0.0
    %602 = vmatprep.subr.mxu0 0.0
    %603 = vmatpush1.msra.mxu0 0.0
    %604 = vmatprep.subr.mxu0 0.0
    %605 = vmatpush1.msra.mxu0 0.0
    %606 = vmatprep.subr.mxu0 0.0
    %607 = vmatpush1.msra.mxu0 0.0
    %608 = vmatprep.subr.mxu0 0.0
    %609 = vmatpush1.msra.mxu0 0.0
    %610 = vmatprep.subr.mxu0 0.0
    %611 = vmatpush1.msra.mxu0 0.0
    %612 = vmatprep.subr.mxu0 0.0
    %613 = vmatpush1.msra.mxu0 0.0
    %614 = vmatprep.subr.mxu0 0.0
    %615 = vmatpush1.msra.mxu0 0.0
    %616 = vmatprep.subr.mxu0 0.0
    %617 = vmatpush1.msra.mxu0 %v269
    %618 = vmatprep.subr.mxu0 0.0
    %619 = vmatpush1.msra.mxu0 %v268
    %620 = vmatprep.subr.mxu0 0.0
    %621 = vmatpush2.msra.mxu0 0.0
    %622 = vmatprep.subr.mxu0 0.0
    %623 = vmatpush2.msra.mxu0 0.0
    %624 = vmatprep.subr.mxu0 0.0
    %625 = vmatpush2.msra.mxu0 0.0
    %626 = vmatprep.subr.mxu0 0.0
    %627 = vmatpush2.msra.mxu0 0.0
    %628 = vmatprep.subr.mxu0 0.0
    %629 = vmatpush2.msra.mxu0 0.0
    %630 = vmatprep.subr.mxu0 0.0
    %631 = vmatpush2.msra.mxu0 0.0
    %632 = vmatprep.subr.mxu0 0.0
    %633 = vmatpush2.msra.mxu0 0.0
    %634 = vmatprep.subr.mxu0 0.0
    %635 = vmatpush2.msra.mxu0 0.0
    %636 = vmatprep.subr.mxu0 0.0
    %637 = vmatpush2.msra.mxu0 0.0
    %638 = vmatprep.subr.mxu0 0.0
    %639 = vmatpush2.msra.mxu0 0.0
    %640 = vmatprep.subr.mxu0 0.0
    %641 = vmatpush2.msra.mxu0 0.0
    %642 = vmatprep.subr.mxu0 0.0
    %643 = vmatpush2.msra.mxu0 0.0
    %644 = vmatprep.subr.mxu0 0.0
    %645 = vmatpush2.msra.mxu0 0.0
    %646 = vmatprep.subr.mxu0 0.0
    %647 = vmatpush2.msra.mxu0 0.0
    %648 = vmatprep.subr.mxu0 0.0
    %649 = vmatpush2.msra.mxu0 0.0
    %650 = vmatprep.subr.mxu0 0.0
    %651 = vmatpush2.msra.mxu0 0.0
    %652 = vmatprep.mubr.f32.mxu0 0.0
    %653 = vmatmul.mubr.f32.gmra.mxu0 %v586
    %v654 = vpop.f32.mrf.mxu0
    %v655 = vadd.f32 0.0, %v654
    %v656 = vpop.f32.mrf.mxu0
    %657 = vdwg.mxu0
    %v658 = vadd.f32 %v376, %v655
    %v659 = vxor.u32 %v658, 2147483648
    %v660 = vmul.f32 %v659, 1.442695
    %v661 = vpow.pop %v660
    %v662 = vadd.f32 %v661, 1.0
    %v663 = vrcp.pop %v662
    %v664 = vmul.f32 1.0, %v663
    %v665 = vmul.f32 %v664, 2.0
    %v666 = vsub.f32 %v665, 1.0
    %v667 = vmul.f32 %v664, %v576
    %669 = vrot.lane.b32.xlu0 %v666, 96
    %v670 = vpop.permute.xlu0 %669
    %v672 = vmul.f32 %v664, %v670
    %674 = vrot.lane.b32.xlu0 %v672, 16
    %v675 = vpop.permute.xlu0 %674
    %v677 = vadd.f32 %v667, %v675
    %v678 = vtanh.pop %v677
    %680 = vrot.lane.b32.xlu0 %v678, 32
    %v681 = vpop.permute.xlu0 %680
    %v683 = vmul.f32 %v664, %v681
    %685 = vrot.lane.b32.xlu0 %v683, 80
    %v686 = vpop.permute.xlu0 %685
    %v687 = vsel %vm382, %v686, 0
    %689 = vmatprep.subr.mxu0 0.0
    %690 = vmatpush1.msra.mxu0 0.0
    %691 = vmatprep.subr.mxu0 0.0
    %692 = vmatpush1.msra.mxu0 0.0
    %693 = vmatprep.subr.mxu0 0.0
    %694 = vmatpush1.msra.mxu0 0.0
    %695 = vmatprep.subr.mxu0 0.0
    %696 = vmatpush1.msra.mxu0 0.0
    %697 = vmatprep.subr.mxu0 0.0
    %698 = vmatpush1.msra.mxu0 0.0
    %699 = vmatprep.subr.mxu0 0.0
    %700 = vmatpush1.msra.mxu0 0.0
    %701 = vmatprep.subr.mxu0 0.0
    %702 = vmatpush1.msra.mxu0 0.0
    %703 = vmatprep.subr.mxu0 0.0
    %704 = vmatpush1.msra.mxu0 0.0
    %705 = vmatprep.subr.mxu0 0.0
    %706 = vmatpush1.msra.mxu0 0.0
    %707 = vmatprep.subr.mxu0 0.0
    %708 = vmatpush1.msra.mxu0 0.0
    %709 = vmatprep.subr.mxu0 0.0
    %710 = vmatpush1.msra.mxu0 0.0
    %711 = vmatprep.subr.mxu0 0.0
    %712 = vmatpush1.msra.mxu0 0.0
    %713 = vmatprep.subr.mxu0 0.0
    %714 = vmatpush1.msra.mxu0 0.0
    %715 = vmatprep.subr.mxu0 0.0
    %716 = vmatpush1.msra.mxu0 0.0
    %717 = vmatprep.subr.mxu0 0.0
    %718 = vmatpush1.msra.mxu0 %v269
    %719 = vmatprep.subr.mxu0 0.0
    %720 = vmatpush1.msra.mxu0 %v268
    %721 = vmatprep.subr.mxu0 0.0
    %722 = vmatpush2.msra.mxu0 0.0
    %723 = vmatprep.subr.mxu0 0.0
    %724 = vmatpush2.msra.mxu0 0.0
    %725 = vmatprep.subr.mxu0 0.0
    %726 = vmatpush2.msra.mxu0 0.0
    %727 = vmatprep.subr.mxu0 0.0
    %728 = vmatpush2.msra.mxu0 0.0
    %729 = vmatprep.subr.mxu0 0.0
    %730 = vmatpush2.msra.mxu0 0.0
    %731 = vmatprep.subr.mxu0 0.0
    %732 = vmatpush2.msra.mxu0 0.0
    %733 = vmatprep.subr.mxu0 0.0
    %734 = vmatpush2.msra.mxu0 0.0
    %735 = vmatprep.subr.mxu0 0.0
    %736 = vmatpush2.msra.mxu0 0.0
    %737 = vmatprep.subr.mxu0 0.0
    %738 = vmatpush2.msra.mxu0 0.0
    %739 = vmatprep.subr.mxu0 0.0
    %740 = vmatpush2.msra.mxu0 0.0
    %741 = vmatprep.subr.mxu0 0.0
    %742 = vmatpush2.msra.mxu0 0.0
    %743 = vmatprep.subr.mxu0 0.0
    %744 = vmatpush2.msra.mxu0 0.0
    %745 = vmatprep.subr.mxu0 0.0
    %746 = vmatpush2.msra.mxu0 0.0
    %747 = vmatprep.subr.mxu0 0.0
    %748 = vmatpush2.msra.mxu0 0.0
    %749 = vmatprep.subr.mxu0 0.0
    %750 = vmatpush2.msra.mxu0 0.0
    %751 = vmatprep.subr.mxu0 0.0
    %752 = vmatpush2.msra.mxu0 0.0
    %753 = vmatprep.mubr.f32.mxu0 0.0
    %754 = vmatmul.mubr.f32.gmra.mxu0 %v687
    %v755 = vpop.f32.mrf.mxu0
    %v756 = vadd.f32 0.0, %v755
    %v757 = vpop.f32.mrf.mxu0
    %758 = vdwg.mxu0
    %v759 = vadd.f32 %v377, %v756
    %v760 = vxor.u32 %v759, 2147483648
    %v761 = vmul.f32 %v760, 1.442695
    %v762 = vpow.pop %v761
    %v763 = vadd.f32 %v762, 1.0
    %v764 = vrcp.pop %v763
    %v765 = vmul.f32 1.0, %v764
    %v766 = vmul.f32 %v765, 2.0
    %v767 = vsub.f32 %v766, 1.0
    %v768 = vmul.f32 %v765, %v677
    %770 = vrot.lane.b32.xlu0 %v767, 96
    %v771 = vpop.permute.xlu0 %770
    %v773 = vmul.f32 %v765, %v771
    %775 = vrot.lane.b32.xlu0 %v773, 16
    %v776 = vpop.permute.xlu0 %775
    %v778 = vadd.f32 %v768, %v776
    %v779 = vtanh.pop %v778
    %781 = vrot.lane.b32.xlu0 %v779, 32
    %v782 = vpop.permute.xlu0 %781
    %v784 = vmul.f32 %v765, %v782
    %786 = vrot.lane.b32.xlu0 %v784, 80
    %v787 = vpop.permute.xlu0 %786
    %v788 = vsel %vm382, %v787, 0
    %790 = vmatprep.subr.mxu0 0.0
    %791 = vmatpush1.msra.mxu0 0.0
    %792 = vmatprep.subr.mxu0 0.0
    %793 = vmatpush1.msra.mxu0 0.0
    %794 = vmatprep.subr.mxu0 0.0
    %795 = vmatpush1.msra.mxu0 0.0
    %796 = vmatprep.subr.mxu0 0.0
    %797 = vmatpush1.msra.mxu0 0.0
    %798 = vmatprep.subr.mxu0 0.0
    %799 = vmatpush1.msra.mxu0 0.0
    %800 = vmatprep.subr.mxu0 0.0
    %801 = vmatpush1.msra.mxu0 0.0
    %802 = vmatprep.subr.mxu0 0.0
    %803 = vmatpush1.msra.mxu0 0.0
    %804 = vmatprep.subr.mxu0 0.0
    %805 = vmatpush1.msra.mxu0 0.0
    %806 = vmatprep.subr.mxu0 0.0
    %807 = vmatpush1.msra.mxu0 0.0
    %808 = vmatprep.subr.mxu0 0.0
    %809 = vmatpush1.msra.mxu0 0.0
    %810 = vmatprep.subr.mxu0 0.0
    %811 = vmatpush1.msra.mxu0 0.0
    %812 = vmatprep.subr.mxu0 0.0
    %813 = vmatpush1.msra.mxu0 0.0
    %814 = vmatprep.subr.mxu0 0.0
    %815 = vmatpush1.msra.mxu0 0.0
    %816 = vmatprep.subr.mxu0 0.0
    %817 = vmatpush1.msra.mxu0 0.0
    %818 = vmatprep.subr.mxu0 0.0
    %819 = vmatpush1.msra.mxu0 %v269
    %820 = vmatprep.subr.mxu0 0.0
    %821 = vmatpush1.msra.mxu0 %v268
    %822 = vmatprep.subr.mxu0 0.0
    %823 = vmatpush2.msra.mxu0 0.0
    %824 = vmatprep.subr.mxu0 0.0
    %825 = vmatpush2.msra.mxu0 0.0
    %826 = vmatprep.subr.mxu0 0.0
    %827 = vmatpush2.msra.mxu0 0.0
    %828 = vmatprep.subr.mxu0 0.0
    %829 = vmatpush2.msra.mxu0 0.0
    %830 = vmatprep.subr.mxu0 0.0
    %831 = vmatpush2.msra.mxu0 0.0
    %832 = vmatprep.subr.mxu0 0.0
    %833 = vmatpush2.msra.mxu0 0.0
    %834 = vmatprep.subr.mxu0 0.0
    %835 = vmatpush2.msra.mxu0 0.0
    %836 = vmatprep.subr.mxu0 0.0
    %837 = vmatpush2.msra.mxu0 0.0
    %838 = vmatprep.subr.mxu0 0.0
    %839 = vmatpush2.msra.mxu0 0.0
    %840 = vmatprep.subr.mxu0 0.0
    %841 = vmatpush2.msra.mxu0 0.0
    %842 = vmatprep.subr.mxu0 0.0
    %843 = vmatpush2.msra.mxu0 0.0
    %844 = vmatprep.subr.mxu0 0.0
    %845 = vmatpush2.msra.mxu0 0.0
    %846 = vmatprep.subr.mxu0 0.0
    %847 = vmatpush2.msra.mxu0 0.0
    %848 = vmatprep.subr.mxu0 0.0
    %849 = vmatpush2.msra.mxu0 0.0
    %850 = vmatprep.subr.mxu0 0.0
    %851 = vmatpush2.msra.mxu0 0.0
    %852 = vmatprep.subr.mxu0 0.0
    %853 = vmatpush2.msra.mxu0 0.0
    %854 = vmatprep.mubr.f32.mxu0 0.0
    %855 = vmatmul.mubr.f32.gmra.mxu0 %v788
    %v856 = vpop.f32.mrf.mxu0
    %v857 = vadd.f32 0.0, %v856
    %v858 = vpop.f32.mrf.mxu0
    %859 = vdwg.mxu0
    %v860 = vadd.f32 %v378, %v857
    %v861 = vxor.u32 %v860, 2147483648
    %v862 = vmul.f32 %v861, 1.442695
    %v863 = vpow.pop %v862
    %v864 = vadd.f32 %v863, 1.0
    %v865 = vrcp.pop %v864
    %v866 = vmul.f32 1.0, %v865
    %v867 = vmul.f32 %v866, 2.0
    %v868 = vsub.f32 %v867, 1.0
    %v869 = vmul.f32 %v866, %v778
    %871 = vrot.lane.b32.xlu0 %v868, 96
    %v872 = vpop.permute.xlu0 %871
    %v874 = vmul.f32 %v866, %v872
    %876 = vrot.lane.b32.xlu0 %v874, 16
    %v877 = vpop.permute.xlu0 %876
    %v879 = vadd.f32 %v869, %v877
    %v880 = vtanh.pop %v879
    %882 = vrot.lane.b32.xlu0 %v880, 32
    %v883 = vpop.permute.xlu0 %882
    %v885 = vmul.f32 %v866, %v883
    %887 = vrot.lane.b32.xlu0 %v885, 80
    %v888 = vpop.permute.xlu0 %887
    %v889 = vsel %vm382, %v888, 0
    %891 = vmatprep.subr.mxu0 0.0
    %892 = vmatpush1.msra.mxu0 0.0
    %893 = vmatprep.subr.mxu0 0.0
    %894 = vmatpush1.msra.mxu0 0.0
    %895 = vmatprep.subr.mxu0 0.0
    %896 = vmatpush1.msra.mxu0 0.0
    %897 = vmatprep.subr.mxu0 0.0
    %898 = vmatpush1.msra.mxu0 0.0
    %899 = vmatprep.subr.mxu0 0.0
    %900 = vmatpush1.msra.mxu0 0.0
    %901 = vmatprep.subr.mxu0 0.0
    %902 = vmatpush1.msra.mxu0 0.0
    %903 = vmatprep.subr.mxu0 0.0
    %904 = vmatpush1.msra.mxu0 0.0
    %905 = vmatprep.subr.mxu0 0.0
    %906 = vmatpush1.msra.mxu0 0.0
    %907 = vmatprep.subr.mxu0 0.0
    %908 = vmatpush1.msra.mxu0 0.0
    %909 = vmatprep.subr.mxu0 0.0
    %910 = vmatpush1.msra.mxu0 0.0
    %911 = vmatprep.subr.mxu0 0.0
    %912 = vmatpush1.msra.mxu0 0.0
    %913 = vmatprep.subr.mxu0 0.0
    %914 = vmatpush1.msra.mxu0 0.0
    %915 = vmatprep.subr.mxu0 0.0
    %916 = vmatpush1.msra.mxu0 0.0
    %917 = vmatprep.subr.mxu0 0.0
    %918 = vmatpush1.msra.mxu0 0.0
    %919 = vmatprep.subr.mxu0 0.0
    %920 = vmatpush1.msra.mxu0 %v269
    %921 = vmatprep.subr.mxu0 0.0
    %922 = vmatpush1.msra.mxu0 %v268
    %923 = vmatprep.subr.mxu0 0.0
    %924 = vmatpush2.msra.mxu0 0.0
    %925 = vmatprep.subr.mxu0 0.0
    %926 = vmatpush2.msra.mxu0 0.0
    %927 = vmatprep.subr.mxu0 0.0
    %928 = vmatpush2.msra.mxu0 0.0
    %929 = vmatprep.subr.mxu0 0.0
    %930 = vmatpush2.msra.mxu0 0.0
    %931 = vmatprep.subr.mxu0 0.0
    %932 = vmatpush2.msra.mxu0 0.0
    %933 = vmatprep.subr.mxu0 0.0
    %934 = vmatpush2.msra.mxu0 0.0
    %935 = vmatprep.subr.mxu0 0.0
    %936 = vmatpush2.msra.mxu0 0.0
    %937 = vmatprep.subr.mxu0 0.0
    %938 = vmatpush2.msra.mxu0 0.0
    %939 = vmatprep.subr.mxu0 0.0
    %940 = vmatpush2.msra.mxu0 0.0
    %941 = vmatprep.subr.mxu0 0.0
    %942 = vmatpush2.msra.mxu0 0.0
    %943 = vmatprep.subr.mxu0 0.0
    %944 = vmatpush2.msra.mxu0 0.0
    %945 = vmatprep.subr.mxu0 0.0
    %946 = vmatpush2.msra.mxu0 0.0
    %947 = vmatprep.subr.mxu0 0.0
    %948 = vmatpush2.msra.mxu0 0.0
    %949 = vmatprep.subr.mxu0 0.0
    %950 = vmatpush2.msra.mxu0 0.0
    %951 = vmatprep.subr.mxu0 0.0
    %952 = vmatpush2.msra.mxu0 0.0
    %953 = vmatprep.subr.mxu0 0.0
    %954 = vmatpush2.msra.mxu0 0.0
    %955 = vmatprep.mubr.f32.mxu0 0.0
    %956 = vmatmul.mubr.f32.gmra.mxu0 %v889
    %v957 = vpop.f32.mrf.mxu0
    %v958 = vadd.f32 0.0, %v957
    %v959 = vpop.f32.mrf.mxu0
    %960 = vdwg.mxu0
    %v961 = vadd.f32 %v379, %v958
    %v962 = vxor.u32 %v961, 2147483648
    %v963 = vmul.f32 %v962, 1.442695
    %v964 = vpow.pop %v963
    %v965 = vadd.f32 %v964, 1.0
    %v966 = vrcp.pop %v965
    %v967 = vmul.f32 1.0, %v966
    %v968 = vmul.f32 %v967, 2.0
    %v969 = vsub.f32 %v968, 1.0
    %v970 = vmul.f32 %v967, %v879
    %972 = vrot.lane.b32.xlu0 %v969, 96
    %v973 = vpop.permute.xlu0 %972
    %v975 = vmul.f32 %v967, %v973
    %977 = vrot.lane.b32.xlu0 %v975, 16
    %v978 = vpop.permute.xlu0 %977
    %v980 = vadd.f32 %v970, %v978
    %v981 = vtanh.pop %v980
    %983 = vrot.lane.b32.xlu0 %v981, 32
    %v984 = vpop.permute.xlu0 %983
    %v986 = vmul.f32 %v967, %v984
    %988 = vrot.lane.b32.xlu0 %v986, 80
    %v989 = vpop.permute.xlu0 %988
    %v990 = vsel %vm382, %v989, 0
    %992 = vmatprep.subr.mxu0 0.0
    %993 = vmatpush1.msra.mxu0 0.0
    %994 = vmatprep.subr.mxu0 0.0
    %995 = vmatpush1.msra.mxu0 0.0
    %996 = vmatprep.subr.mxu0 0.0
    %997 = vmatpush1.msra.mxu0 0.0
    %998 = vmatprep.subr.mxu0 0.0
    %999 = vmatpush1.msra.mxu0 0.0
    %1000 = vmatprep.subr.mxu0 0.0
    %1001 = vmatpush1.msra.mxu0 0.0
    %1002 = vmatprep.subr.mxu0 0.0
    %1003 = vmatpush1.msra.mxu0 0.0
    %1004 = vmatprep.subr.mxu0 0.0
    %1005 = vmatpush1.msra.mxu0 0.0
    %1006 = vmatprep.subr.mxu0 0.0
    %1007 = vmatpush1.msra.mxu0 0.0
    %1008 = vmatprep.subr.mxu0 0.0
    %1009 = vmatpush1.msra.mxu0 0.0
    %1010 = vmatprep.subr.mxu0 0.0
    %1011 = vmatpush1.msra.mxu0 0.0
    %1012 = vmatprep.subr.mxu0 0.0
    %1013 = vmatpush1.msra.mxu0 0.0
    %1014 = vmatprep.subr.mxu0 0.0
    %1015 = vmatpush1.msra.mxu0 0.0
    %1016 = vmatprep.subr.mxu0 0.0
    %1017 = vmatpush1.msra.mxu0 0.0
    %1018 = vmatprep.subr.mxu0 0.0
    %1019 = vmatpush1.msra.mxu0 0.0
    %1020 = vmatprep.subr.mxu0 0.0
    %1021 = vmatpush1.msra.mxu0 %v269
    %1022 = vmatprep.subr.mxu0 0.0
    %1023 = vmatpush1.msra.mxu0 %v268
    %1024 = vmatprep.subr.mxu0 0.0
    %1025 = vmatpush2.msra.mxu0 0.0
    %1026 = vmatprep.subr.mxu0 0.0
    %1027 = vmatpush2.msra.mxu0 0.0
    %1028 = vmatprep.subr.mxu0 0.0
    %1029 = vmatpush2.msra.mxu0 0.0
    %1030 = vmatprep.subr.mxu0 0.0
    %1031 = vmatpush2.msra.mxu0 0.0
    %1032 = vmatprep.subr.mxu0 0.0
    %1033 = vmatpush2.msra.mxu0 0.0
    %1034 = vmatprep.subr.mxu0 0.0
    %1035 = vmatpush2.msra.mxu0 0.0
    %1036 = vmatprep.subr.mxu0 0.0
    %1037 = vmatpush2.msra.mxu0 0.0
    %1038 = vmatprep.subr.mxu0 0.0
    %1039 = vmatpush2.msra.mxu0 0.0
    %1040 = vmatprep.subr.mxu0 0.0
    %1041 = vmatpush2.msra.mxu0 0.0
    %1042 = vmatprep.subr.mxu0 0.0
    %1043 = vmatpush2.msra.mxu0 0.0
    %1044 = vmatprep.subr.mxu0 0.0
    %1045 = vmatpush2.msra.mxu0 0.0
    %1046 = vmatprep.subr.mxu0 0.0
    %1047 = vmatpush2.msra.mxu0 0.0
    %1048 = vmatprep.subr.mxu0 0.0
    %1049 = vmatpush2.msra.mxu0 0.0
    %1050 = vmatprep.subr.mxu0 0.0
    %1051 = vmatpush2.msra.mxu0 0.0
    %1052 = vmatprep.subr.mxu0 0.0
    %1053 = vmatpush2.msra.mxu0 0.0
    %1054 = vmatprep.subr.mxu0 0.0
    %1055 = vmatpush2.msra.mxu0 0.0
    %1056 = vmatprep.mubr.f32.mxu0 0.0
    %1057 = vmatmul.mubr.f32.gmra.mxu0 %v990
    %v1058 = vpop.f32.mrf.mxu0
    %v1059 = vadd.f32 0.0, %v1058
    %v1060 = vpop.f32.mrf.mxu0
    %1061 = vdwg.mxu0
    %v1062 = vadd.f32 %v380, %v1059
    %v1063 = vxor.u32 %v1062, 2147483648
    %v1064 = vmul.f32 %v1063, 1.442695
    %v1065 = vpow.pop %v1064
    %v1066 = vadd.f32 %v1065, 1.0
    %v1067 = vrcp.pop %v1066
    %v1068 = vmul.f32 1.0, %v1067
    %v1069 = vmul.f32 %v1068, 2.0
    %v1070 = vsub.f32 %v1069, 1.0
    %v1071 = vmul.f32 %v1068, %v980
    %1073 = vrot.lane.b32.xlu0 %v1070, 96
    %v1074 = vpop.permute.xlu0 %1073
    %v1076 = vmul.f32 %v1068, %v1074
    %1078 = vrot.lane.b32.xlu0 %v1076, 16
    %v1079 = vpop.permute.xlu0 %1078
    %v1081 = vadd.f32 %v1071, %v1079
    %v1082 = vtanh.pop %v1081
    %1084 = vrot.lane.b32.xlu0 %v1082, 32
    %v1085 = vpop.permute.xlu0 %1084
    %v1087 = vmul.f32 %v1068, %v1085
    %1089 = vrot.lane.b32.xlu0 %v1087, 80
    %v1090 = vpop.permute.xlu0 %1089
    %v1091 = vsel %vm382, %v1090, 0
    %1093 = vmatprep.subr.mxu0 0.0
    %1094 = vmatpush1.msra.mxu0 0.0
    %1095 = vmatprep.subr.mxu0 0.0
    %1096 = vmatpush1.msra.mxu0 0.0
    %1097 = vmatprep.subr.mxu0 0.0
    %1098 = vmatpush1.msra.mxu0 0.0
    %1099 = vmatprep.subr.mxu0 0.0
    %1100 = vmatpush1.msra.mxu0 0.0
    %1101 = vmatprep.subr.mxu0 0.0
    %1102 = vmatpush1.msra.mxu0 0.0
    %1103 = vmatprep.subr.mxu0 0.0
    %1104 = vmatpush1.msra.mxu0 0.0
    %1105 = vmatprep.subr.mxu0 0.0
    %1106 = vmatpush1.msra.mxu0 0.0
    %1107 = vmatprep.subr.mxu0 0.0
    %1108 = vmatpush1.msra.mxu0 0.0
    %1109 = vmatprep.subr.mxu0 0.0
    %1110 = vmatpush1.msra.mxu0 0.0
    %1111 = vmatprep.subr.mxu0 0.0
    %1112 = vmatpush1.msra.mxu0 0.0
    %1113 = vmatprep.subr.mxu0 0.0
    %1114 = vmatpush1.msra.mxu0 0.0
    %1115 = vmatprep.subr.mxu0 0.0
    %1116 = vmatpush1.msra.mxu0 0.0
    %1117 = vmatprep.subr.mxu0 0.0
    %1118 = vmatpush1.msra.mxu0 0.0
    %1119 = vmatprep.subr.mxu0 0.0
    %1120 = vmatpush1.msra.mxu0 0.0
    %1121 = vmatprep.subr.mxu0 0.0
    %1122 = vmatpush1.msra.mxu0 %v269
    %1123 = vmatprep.subr.mxu0 0.0
    %1124 = vmatpush1.msra.mxu0 %v268
    %1125 = vmatprep.subr.mxu0 0.0
    %1126 = vmatpush2.msra.mxu0 0.0
    %1127 = vmatprep.subr.mxu0 0.0
    %1128 = vmatpush2.msra.mxu0 0.0
    %1129 = vmatprep.subr.mxu0 0.0
    %1130 = vmatpush2.msra.mxu0 0.0
    %1131 = vmatprep.subr.mxu0 0.0
    %1132 = vmatpush2.msra.mxu0 0.0
    %1133 = vmatprep.subr.mxu0 0.0
    %1134 = vmatpush2.msra.mxu0 0.0
    %1135 = vmatprep.subr.mxu0 0.0
    %1136 = vmatpush2.msra.mxu0 0.0
    %1137 = vmatprep.subr.mxu0 0.0
    %1138 = vmatpush2.msra.mxu0 0.0
    %1139 = vmatprep.subr.mxu0 0.0
    %1140 = vmatpush2.msra.mxu0 0.0
    %1141 = vmatprep.subr.mxu0 0.0
    %1142 = vmatpush2.msra.mxu0 0.0
    %1143 = vmatprep.subr.mxu0 0.0
    %1144 = vmatpush2.msra.mxu0 0.0
    %1145 = vmatprep.subr.mxu0 0.0
    %1146 = vmatpush2.msra.mxu0 0.0
    %1147 = vmatprep.subr.mxu0 0.0
    %1148 = vmatpush2.msra.mxu0 0.0
    %1149 = vmatprep.subr.mxu0 0.0
    %1150 = vmatpush2.msra.mxu0 0.0
    %1151 = vmatprep.subr.mxu0 0.0
    %1152 = vmatpush2.msra.mxu0 0.0
    %1153 = vmatprep.subr.mxu0 0.0
    %1154 = vmatpush2.msra.mxu0 0.0
    %1155 = vmatprep.subr.mxu0 0.0
    %1156 = vmatpush2.msra.mxu0 0.0
    %1157 = vmatprep.mubr.f32.mxu0 0.0
    %1158 = vmatmul.mubr.f32.gmra.mxu0 %v1091
    %v1159 = vpop.f32.mrf.mxu0
    %v1160 = vadd.f32 0.0, %v1159
    %v1161 = vpop.f32.mrf.mxu0
    %1162 = vdwg.mxu0
    %v1163 = vadd.f32 %v381, %v1160
    %v1164 = vxor.u32 %v1163, 2147483648
    %v1165 = vmul.f32 %v1164, 1.442695
    %v1166 = vpow.pop %v1165
    %v1167 = vadd.f32 %v1166, 1.0
    %v1168 = vrcp.pop %v1167
    %v1169 = vmul.f32 1.0, %v1168
    %v1170 = vmul.f32 %v1169, 2.0
    %v1171 = vsub.f32 %v1170, 1.0
    %v1172 = vmul.f32 %v1169, %v1081
    %1174 = vrot.lane.b32.xlu0 %v1171, 96
    %v1175 = vpop.permute.xlu0 %1174
    %v1177 = vmul.f32 %v1169, %v1175
    %1179 = vrot.lane.b32.xlu0 %v1177, 16
    %v1180 = vpop.permute.xlu0 %1179
    %v1182 = vadd.f32 %v1172, %v1180
    %v1183 = vtanh.pop %v1182
    %1185 = vrot.lane.b32.xlu0 %v1183, 32
    %v1186 = vpop.permute.xlu0 %1185
    %v1188 = vmul.f32 %v1169, %v1186
    %v1189 = vld [vmem:[#allocation6 + $0x40] sm:$0xff]
    %v1190 = vld [vmem:[#allocation6 + $0x48] sm:$0xff]
    %1192 = vset.pattern.permute.xlu0 7
    %1193 = vperm.xlu0 %1192, %v70
    %v1194 = vpop.permute.xlu0 %1193
    %v1196 = vlaneseq
    %v1197 = vshrl.u32 %v1196, 7
    %v1198 = vsub.s32 6, %v1197
    %v1199 = vrot.slane %v68, %v1198
    %v1200 = vmul.f32 %v1194, %v1199
    %1202 = vrot.lane.b32.xlu0 %v1188, 80
    %v1203 = vpop.permute.xlu0 %1202
    %v1204 = vsel %vm382, %v1203, 0
    %1206 = vmatprep.subr.mxu0 0.0
    %1207 = vmatpush1.msra.mxu0 0.0
    %1208 = vmatprep.subr.mxu0 0.0
    %1209 = vmatpush1.msra.mxu0 0.0
    %1210 = vmatprep.subr.mxu0 0.0
    %1211 = vmatpush1.msra.mxu0 0.0
    %1212 = vmatprep.subr.mxu0 0.0
    %1213 = vmatpush1.msra.mxu0 0.0
    %1214 = vmatprep.subr.mxu0 0.0
    %1215 = vmatpush1.msra.mxu0 0.0
    %1216 = vmatprep.subr.mxu0 0.0
    %1217 = vmatpush1.msra.mxu0 0.0
    %1218 = vmatprep.subr.mxu0 0.0
    %1219 = vmatpush1.msra.mxu0 0.0
    %1220 = vmatprep.subr.mxu0 0.0
    %1221 = vmatpush1.msra.mxu0 0.0
    %1222 = vmatprep.subr.mxu0 0.0
    %1223 = vmatpush1.msra.mxu0 0.0
    %1224 = vmatprep.subr.mxu0 0.0
    %1225 = vmatpush1.msra.mxu0 0.0
    %1226 = vmatprep.subr.mxu0 0.0
    %1227 = vmatpush1.msra.mxu0 0.0
    %1228 = vmatprep.subr.mxu0 0.0
    %1229 = vmatpush1.msra.mxu0 0.0
    %1230 = vmatprep.subr.mxu0 0.0
    %1231 = vmatpush1.msra.mxu0 0.0
    %1232 = vmatprep.subr.mxu0 0.0
    %1233 = vmatpush1.msra.mxu0 0.0
    %1234 = vmatprep.subr.mxu0 0.0
    %1235 = vmatpush1.msra.mxu0 %v1190
    %1236 = vmatprep.subr.mxu0 0.0
    %1237 = vmatpush1.msra.mxu0 %v1189
    %1238 = vmatprep.subr.mxu0 0.0
    %1239 = vmatpush2.msra.mxu0 0.0
    %1240 = vmatprep.subr.mxu0 0.0
    %1241 = vmatpush2.msra.mxu0 0.0
    %1242 = vmatprep.subr.mxu0 0.0
    %1243 = vmatpush2.msra.mxu0 0.0
    %1244 = vmatprep.subr.mxu0 0.0
    %1245 = vmatpush2.msra.mxu0 0.0
    %1246 = vmatprep.subr.mxu0 0.0
    %1247 = vmatpush2.msra.mxu0 0.0
    %1248 = vmatprep.subr.mxu0 0.0
    %1249 = vmatpush2.msra.mxu0 0.0
    %1250 = vmatprep.subr.mxu0 0.0
    %1251 = vmatpush2.msra.mxu0 0.0
    %1252 = vmatprep.subr.mxu0 0.0
    %1253 = vmatpush2.msra.mxu0 0.0
    %1254 = vmatprep.subr.mxu0 0.0
    %1255 = vmatpush2.msra.mxu0 0.0
    %1256 = vmatprep.subr.mxu0 0.0
    %1257 = vmatpush2.msra.mxu0 0.0
    %1258 = vmatprep.subr.mxu0 0.0
    %1259 = vmatpush2.msra.mxu0 0.0
    %1260 = vmatprep.subr.mxu0 0.0
    %1261 = vmatpush2.msra.mxu0 0.0
    %1262 = vmatprep.subr.mxu0 0.0
    %1263 = vmatpush2.msra.mxu0 0.0
    %1264 = vmatprep.subr.mxu0 0.0
    %1265 = vmatpush2.msra.mxu0 0.0
    %1266 = vmatprep.subr.mxu0 0.0
    %1267 = vmatpush2.msra.mxu0 0.0
    %1268 = vmatprep.subr.mxu0 0.0
    %1269 = vmatpush2.msra.mxu0 0.0
    %1270 = vmatprep.mubr.f32.mxu0 0.0
    %1271 = vmatmul.mubr.f32.gmra.mxu0 %v1204
    %v1272 = vpop.f32.mrf.mxu0
    %v1273 = vadd.f32 %v1200, %v1272
    %v1274 = vpop.f32.mrf.mxu0
    %1275 = vdwg.mxu0
    %v1276 = vlaneseq
    %v1277 = vshrl.u32 %v1276, 7
    %v1278 = vsub.s32 7, %v1277
    %v1279 = vrot.slane %v68, %v1278
    %v1280 = vadd.f32 %v1273, %v1279
    %v1281 = vsel %vm151, %v1280, 0.0
    %v1282 = vrot.slane %v1281, 4
    %v1283 = vadd.f32 %v1281, %v1282
    %v1284 = vrot.slane %v1283, 2
    %v1285 = vadd.f32 %v1283, %v1284
    %v1286 = vrot.slane %v1285, 1
    %v1287 = vadd.f32 %v1285, %v1286
    %v1288 = vmul.f32 %v1287, %v159
    %v1289 = vsub.f32 %v1280, %v1288
    %v1290 = vmul.f32 %v1289, %v1289
    %v1291 = vsel %vm151, %v1290, 0.0
    %v1292 = vrot.slane %v1291, 4
    %v1293 = vadd.f32 %v1291, %v1292
    %v1294 = vrot.slane %v1293, 2
    %v1295 = vadd.f32 %v1293, %v1294
    %v1296 = vrot.slane %v1295, 1
    %v1297 = vadd.f32 %v1295, %v1296
    %v1298 = vmul.f32 %v1297, %v159
    %v1299 = vadd.f32 %v1298, 1e-05
    %v1300 = vrsqrt.pop %v1299
    %v1301 = vmul.f32 %v1289, %v1300
    %v1302 = vlaneseq
    %v1303 = vshrl.u32 %v1302, 7
    %v1304 = vsub.s32 0, %v1303
    %v1305 = vrot.slane %v69, %v1304
    %v1306 = vmul.f32 %v1301, %v1305
    %v1307 = vlaneseq
    %v1308 = vshrl.u32 %v1307, 7
    %v1309 = vsub.s32 1, %v1308
    %v1310 = vrot.slane %v69, %v1309
    %v1311 = vadd.f32 %v1306, %v1310
    %v1312 = vmax.f32 %v1311, 0.0
    %v1313 = vld [vmem:[#allocation6 + $0x50] sm:$0xff]
    %v1314 = vld [vmem:[#allocation6 + $0x58] sm:$0xff]
    %v1315 = vld [vmem:[#allocation6 + $0x60] sm:$0xff]
    %v1316 = vld [vmem:[#allocation6 + $0x68] sm:$0xff]
    %v1317 = vld [vmem:[#allocation6 + $0x70] sm:$0xff]
    %v1318 = vlaneseq
    %v1319 = vshrl.u32 %v1318, 7
    %v1320 = vsub.s32 2, %v1319
    %v1321 = vrot.slane %v69, %v1320
    %v1323 = vsel %vm194, %v1312, 0
    %1325 = vmatprep.subr.mxu0 0.0
    %1326 = vmatpush1.msra.mxu0 0.0
    %1327 = vmatprep.subr.mxu0 0.0
    %1328 = vmatpush1.msra.mxu0 0.0
    %1329 = vmatprep.subr.mxu0 0.0
    %1330 = vmatpush1.msra.mxu0 0.0
    %1331 = vmatprep.subr.mxu0 0.0
    %1332 = vmatpush1.msra.mxu0 0.0
    %1333 = vmatprep.subr.mxu0 0.0
    %1334 = vmatpush1.msra.mxu0 0.0
    %1335 = vmatprep.subr.mxu0 0.0
    %1336 = vmatpush1.msra.mxu0 0.0
    %1337 = vmatprep.subr.mxu0 0.0
    %1338 = vmatpush1.msra.mxu0 0.0
    %1339 = vmatprep.subr.mxu0 0.0
    %1340 = vmatpush1.msra.mxu0 0.0
    %1341 = vmatprep.subr.mxu0 0.0
    %1342 = vmatpush1.msra.mxu0 0.0
    %1343 = vmatprep.subr.mxu0 0.0
    %1344 = vmatpush1.msra.mxu0 0.0
    %1345 = vmatprep.subr.mxu0 0.0
    %1346 = vmatpush1.msra.mxu0 0.0
    %1347 = vmatprep.subr.mxu0 0.0
    %1348 = vmatpush1.msra.mxu0 %v1317
    %1349 = vmatprep.subr.mxu0 0.0
    %1350 = vmatpush1.msra.mxu0 %v1316
    %1351 = vmatprep.subr.mxu0 0.0
    %1352 = vmatpush1.msra.mxu0 %v1315
    %1353 = vmatprep.subr.mxu0 0.0
    %1354 = vmatpush1.msra.mxu0 %v1314
    %1355 = vmatprep.subr.mxu0 0.0
    %1356 = vmatpush1.msra.mxu0 %v1313
    %1357 = vmatprep.subr.mxu0 0.0
    %1358 = vmatpush2.msra.mxu0 0.0
    %1359 = vmatprep.subr.mxu0 0.0
    %1360 = vmatpush2.msra.mxu0 0.0
    %1361 = vmatprep.subr.mxu0 0.0
    %1362 = vmatpush2.msra.mxu0 0.0
    %1363 = vmatprep.subr.mxu0 0.0
    %1364 = vmatpush2.msra.mxu0 0.0
    %1365 = vmatprep.subr.mxu0 0.0
    %1366 = vmatpush2.msra.mxu0 0.0
    %1367 = vmatprep.subr.mxu0 0.0
    %1368 = vmatpush2.msra.mxu0 0.0
    %1369 = vmatprep.subr.mxu0 0.0
    %1370 = vmatpush2.msra.mxu0 0.0
    %1371 = vmatprep.subr.mxu0 0.0
    %1372 = vmatpush2.msra.mxu0 0.0
    %1373 = vmatprep.subr.mxu0 0.0
    %1374 = vmatpush2.msra.mxu0 0.0
    %1375 = vmatprep.subr.mxu0 0.0
    %1376 = vmatpush2.msra.mxu0 0.0
    %1377 = vmatprep.subr.mxu0 0.0
    %1378 = vmatpush2.msra.mxu0 0.0
    %1379 = vmatprep.subr.mxu0 0.0
    %1380 = vmatpush2.msra.mxu0 0.0
    %1381 = vmatprep.subr.mxu0 0.0
    %1382 = vmatpush2.msra.mxu0 0.0
    %1383 = vmatprep.subr.mxu0 0.0
    %1384 = vmatpush2.msra.mxu0 0.0
    %1385 = vmatprep.subr.mxu0 0.0
    %1386 = vmatpush2.msra.mxu0 0.0
    %1387 = vmatprep.subr.mxu0 0.0
    %1388 = vmatpush2.msra.mxu0 0.0
    %1389 = vmatprep.mubr.f32.mxu0 0.0
    %1390 = vmatmul.mubr.f32.gmra.mxu0 %v1323
    %v1391 = vpop.f32.mrf.mxu0
    %v1392 = vadd.f32 %v1321, %v1391
    %v1393 = vpop.f32.mrf.mxu0
    %1394 = vdwg.mxu0
    %vm1395 = vcmask 3072
    %1396 = vst.msk [vmem:[%s4] sm:$0xf] %vm1395, %v1392
    // Predicated region
    $region34: #{tpu_custom_call.1} parent=1 // pred_check
      _
    $region35: #{tpu_custom_call.1} parent=1 // pred_check_branch
      %1398 = sbr.rel (0) target = $region37
    $region36: #{tpu_custom_call.1} parent=1 // pred_region
      _
    $region37: #{tpu_custom_call.1} parent=1 // pred_fallthru
      _
    // Predicated region
    $region38: #{tpu_custom_call.1} parent=1 // pred_check
      _
    $region39: #{tpu_custom_call.1} parent=1 // pred_check_branch
      %1400 = sbr.rel (0) target = $region41
    $region40: #{tpu_custom_call.1} parent=1 // pred_region
      _
    $region41: #{tpu_custom_call.1} parent=1 // pred_fallthru
      _
    %1401 = vsyncpa [#allocation3], 1
    %1402 = vsyncpa [#allocation5], 1
    %1403 = vsyncpa [#allocation8], 1

</llo_original>
